<compile_context>
chip_gen: v5e
topology: v5e:2x2
jax: 0.10.0
libtpu: 0.0.40
codegen_flags: <defaults>
</compile_context>

<pallas_src>
import functools

import jax
import jax.numpy as jnp
from jax import lax
from jax.experimental import pallas as pl
from jax.experimental.pallas import tpu as pltpu


def _attn_msa_kernel(num_heads, head_dim,
                     x_ref, wv_ref, mask_ref, eye_ref,
                     out_ref, sim_ref):
    N = x_ref.shape[1]
    C = x_ref.shape[2]
    H, hd = num_heads, head_dim

    x = x_ref[0]                      # (N, C) f32
    w_v = wv_ref[...]                 # (C, C) torch layout (out_features, in_features)
    mask = mask_ref[...]              # (H*N, C): 1 where lane c belongs to block head h
    eye_p = eye_ref[...]              # (N, H*N): 1 where row n == within-block column m

    # Value projection only (rows of the torch Linear weight are output features).
    v = lax.dot_general(x, w_v, (((1,), (1,)), ((), ())),
                        preferred_element_type=jnp.float32)          # (N, C)

    # Head-packed value matrix: V_stack[h*N + m, c] = v[m, c] * (head(c) == h).
    v_bf = v.astype(jnp.bfloat16)
    mask_bf = mask.astype(jnp.bfloat16)
    v_stack_bf = jnp.concatenate([v_bf] * H, axis=0) * mask_bf       # (H*N, C) bf16

    # Per-head gram of unnormalized v, packed along lanes:
    #   s[n, h*N+m] = <v[n, head h], v[m, head h]>
    s = lax.dot_general(v_bf, v_stack_bf, (((1,), (1,)), ((), ())),
                        preferred_element_type=jnp.float32)          # (N, H*N)

    # Per-head squared norms broadcast straight into the packed layout (f32):
    #   d_sq[n, h*N+m] = ||v[n, head h]||^2   (independent of m)
    d_sq = lax.dot_general(v * v, mask, (((1,), (1,)), ((), ())),
                           preferred_element_type=jnp.float32)       # (N, H*N)
    inv_row = lax.rsqrt(d_sq)                                        # rsqrt(||v[n,h]||^2)
    # Column factor rsqrt(||v[m,h]||^2): per-block diagonal of inv_row as a lane row.
    inv_col = jnp.sum(inv_row * eye_p, axis=0, keepdims=True)        # (1, H*N)

    raw = s * inv_row * inv_col                                      # packed cosine sims

    # Blocked softmax over m with scale 25.  Subtracting one full-row max is a
    # per-row constant, hence valid for every head block (diag cosine == 1
    # keeps the max ~25, so exp never overflows).
    logits = raw * 25.0
    e = jnp.exp(logits - jnp.max(logits, axis=-1, keepdims=True))    # (N, H*N)
    e_bf = e.astype(jnp.bfloat16)

    # Softmax denominator already broadcast to (N, C): s_bcast[n, c] = sum_m e[n, head(c), m]
    s_bcast = lax.dot_general(e_bf, mask_bf, (((1,), (0,)), ((), ())),
                              preferred_element_type=jnp.float32)    # (N, C)
    # Numerator: u[n, c] = sum_m e[n, head(c), m] * v[m, c]
    u = lax.dot_general(e_bf, v_stack_bf, (((1,), (0,)), ((), ())),
                        preferred_element_type=jnp.float32)          # (N, C)
    xh = u * pl.reciprocal(s_bcast, approx=True)                     # (attn @ v), heads concat

    # Lane-dense stores at 128-aligned offsets: cat([x, x_ori], dim=-1).
    out_ref[0, :, :C] = xh.astype(out_ref.dtype)
    out_ref[0, :, C:] = v.astype(out_ref.dtype)

    # Similarity branch: the wrapper only returns batch 0, so skip it elsewhere.
    b = pl.program_id(0)

    @pl.when(b == 0)
    def _():
        inv_h = 1.0 / H
        # Head-mean of the raw cosines: fold the H lane blocks with the eye mask.
        raw_mean = lax.dot_general(raw, eye_p, (((1,), (1,)), ((), ())),
                                   preferred_element_type=jnp.float32) * inv_h   # (N, N)
        # Per-(n, h) softmax denominator back in packed layout, recovered from
        # s_bcast with the same resident mask (each head block repeats hd times).
        s_pack = lax.dot_general(s_bcast, mask, (((1,), (1,)), ((), ())),
                                 preferred_element_type=jnp.float32) * (1.0 / hd)
        attn_pack = e * pl.reciprocal(s_pack, approx=True)                        # (N, H*N)
        attn_mean = lax.dot_general(attn_pack, eye_p, (((1,), (1,)), ((), ())),
                                    preferred_element_type=jnp.float32) * inv_h   # (N, N)

        sm = jnp.exp(attn_mean - jnp.max(attn_mean, axis=-1, keepdims=True))
        sim_r = sm * pl.reciprocal(jnp.sum(sm, axis=-1, keepdims=True), approx=True)
        sim_mask = jnp.where(raw_mean > 0.75, 1.0, 0.0)
        masked = sim_mask * sim_r
        # Rows with an all-zero mask divide by zero exactly like torch; the
        # diagonal cosine is 1 > 0.75, so this cannot happen for nonzero v.
        sim_ref[0] = (masked * pl.reciprocal(
            jnp.sum(masked, axis=-1, keepdims=True), approx=True)).astype(sim_ref.dtype)

    @pl.when(b != 0)
    def _():
        sim_ref[...] = jnp.zeros(sim_ref.shape, sim_ref.dtype)   # unused by the wrapper


def attention_msa_visual(x_cls, x_reg, w_qkv_cls, w_qkv_reg, num_heads=8):
    """Forward of Attention_msa_visual with cls_score=fg_score=img=pred=None.

    x_reg / w_qkv_reg only feed attn_reg, which (like attn_cls, the q/k norms
    and the p=0 dropout) never reaches the returned tensors, so they are not
    touched.
    """
    B, N, C = x_cls.shape
    H = num_heads
    hd = C // H
    HN = H * N

    # Pre-slice the value slab of the torch-layout (3C, C) weight: exactly one
    # 64 KiB HBM fetch regardless of B.
    w_v = w_qkv_cls[2 * C:3 * C, :]

    # Head-packing constants, resident in VMEM across the grid (constant index maps).
    j = jnp.arange(HN)
    mask_stack = ((j[:, None] // N) ==
                  (jnp.arange(C)[None, :] // hd)).astype(jnp.float32)   # (H*N, C)
    eye_pack = (jnp.arange(N)[:, None] ==
                (j[None, :] % N)).astype(jnp.float32)                   # (N, H*N)

    kernel = functools.partial(_attn_msa_kernel, H, hd)
    out_shapes = (
        jax.ShapeDtypeStruct((B, N, 2 * C), x_cls.dtype),   # cat([x, x_ori], -1)
        jax.ShapeDtypeStruct((B, N, N), jnp.float32),       # sim_round2 (batch 0 valid)
    )
    grid_spec = pltpu.PrefetchScalarGridSpec(
        num_scalar_prefetch=0,
        grid=(B,),
        in_specs=[
            pl.BlockSpec((1, N, C), lambda b: (b, 0, 0)),   # x_cls
            pl.BlockSpec((C, C), lambda b: (0, 0)),         # value weight slab
            pl.BlockSpec((HN, C), lambda b: (0, 0)),        # head mask (resident)
            pl.BlockSpec((N, HN), lambda b: (0, 0)),        # per-block eye (resident)
        ],
        out_specs=[
            pl.BlockSpec((1, N, 2 * C), lambda b: (b, 0, 0)),
            pl.BlockSpec((1, N, N), lambda b: (b, 0, 0)),
        ],
    )
    x_out, sim_all = pl.pallas_call(
        kernel,
        out_shape=out_shapes,
        grid_spec=grid_spec,
        # "parallel" shards the batch axis across TensorCores on v7x; it is a
        # no-op on single-TC v5e/v6e where the 2-step grid overhead is ~0.7 us.
        compiler_params=pltpu.CompilerParams(
            dimension_semantics=("parallel",)),
    )(x_cls, w_v, mask_stack, eye_pack)

    del x_reg, w_qkv_reg  # dead w.r.t. returned values (see docstring)
    # TODO(synk): visual_sim(...) is a matplotlib/file visualization side effect
    # with no Pallas equivalent; it does not affect the returned tensors.
    # torch returns (x_cls, None, sim_round2); sim_round2 uses batch 0 only.
    return x_out, None, sim_all[0]


def _reference(x_cls, x_reg, w_c, w_r, num_heads):
    """Pure-JAX replica of the torch forward (default None scores)."""
    B, N, C = x_cls.shape
    H = num_heads
    hd = C // H
    qkv_c = (x_cls @ w_c.T).reshape(B, N, 3, H, hd).transpose(2, 0, 3, 1, 4)
    v_c = qkv_c[2]
    v_cn = v_c / jnp.linalg.norm(v_c, axis=-1, keepdims=True)
    raw = v_cn @ jnp.swapaxes(v_cn, -2, -1)
    attn = jax.nn.softmax(raw * 25.0, axis=-1)
    x = jnp.swapaxes(attn @ v_c, 1, 2).reshape(B, N, C)
    x_ori = jnp.transpose(v_c, (0, 2, 1, 3)).reshape(B, N, C)
    x_out = jnp.concatenate([x, x_ori], axis=-1)
    raw_mean = jnp.sum(raw, axis=1)[0] / H
    mask = jnp.where(raw_mean > 0.75, 1.0, 0.0)
    sim = jax.nn.softmax(jnp.sum(attn, axis=1)[0] / H, axis=-1)
    m = mask * sim
    return x_out, m / jnp.sum(m, axis=-1, keepdims=True)


if __name__ == "__main__":
    B, N, C, H = 2, 32, 128, 8     # dim=128, 8 heads -> head_dim=16
    key = jax.random.PRNGKey(0)
    k1, k2, k3, k4 = jax.random.split(key, 4)
    x_cls = jax.random.normal(k1, (B, N, C), jnp.float32)
    x_reg = jax.random.normal(k2, (B, N, C), jnp.float32)
    # Deterministic Linear(dim, 3*dim, bias=False) weights in torch layout (3C, C).
    w_qkv_cls = jax.random.normal(k3, (3 * C, C), jnp.float32) * (1.0 / jnp.sqrt(C))
    w_qkv_reg = jax.random.normal(k4, (3 * C, C), jnp.float32) * (1.0 / jnp.sqrt(C))

    x_out, none_out, sim_round2 = attention_msa_visual(
        x_cls, x_reg, w_qkv_cls, w_qkv_reg, num_heads=H)
    jax.block_until_ready((x_out, sim_round2))

    ref_x, ref_sim = _reference(x_cls, x_reg, w_qkv_cls, w_qkv_reg, H)
    assert none_out is None
    assert x_out.shape == (B, N, 2 * C)
    assert sim_round2.shape == (N, N)
    assert float(jnp.max(jnp.abs(x_out - ref_x))) < 5e-2
    assert float(jnp.max(jnp.abs(sim_round2 - ref_sim))) < 5e-2
    print("KERNEL_OK")
</pallas_src>

<mosaic_0001>
module attributes {stable_mosaic.version = 11 : i64} {
  func.func @_attn_msa_kernel(%arg0: i32, %arg1: memref<1x32x128xf32, #tpu.memory_space<vmem>>, %arg2: memref<128x128xf32, #tpu.memory_space<vmem>>, %arg3: memref<256x128xf32, #tpu.memory_space<vmem>>, %arg4: memref<32x256xf32, #tpu.memory_space<vmem>>, %arg5: memref<1x32x256xf32, #tpu.memory_space<vmem>>, %arg6: memref<1x32x32xf32, #tpu.memory_space<vmem>>) attributes {dimension_semantics = [#tpu.dimension_semantics<parallel>], iteration_bounds = array<i64: 2>, scalar_prefetch = 0 : i64, scratch_operands = 0 : i64, tpu.core_type = #tpu.core_type<tc>, window_params = [{transform_indices = @transform_0, window_bounds = array<i64: 1, 32, 128>}, {pipeline_mode = #tpu.pipeline_mode<synchronous>, transform_indices = @transform_1, window_bounds = array<i64: 128, 128>}, {pipeline_mode = #tpu.pipeline_mode<synchronous>, transform_indices = @transform_2, window_bounds = array<i64: 256, 128>}, {pipeline_mode = #tpu.pipeline_mode<synchronous>, transform_indices = @transform_3, window_bounds = array<i64: 32, 256>}, {transform_indices = @transform_4, window_bounds = array<i64: 1, 32, 256>}, {transform_indices = @transform_5, window_bounds = array<i64: 1, 32, 32>}]} {
    %c0 = arith.constant 0 : index
    %c0_0 = arith.constant 0 : index
    %c0_1 = arith.constant 0 : index
    %0 = vector.load %arg1[%c0, %c0_0, %c0_1] : memref<1x32x128xf32, #tpu.memory_space<vmem>>, vector<1x32x128xf32>
    %1 = vector.shape_cast %0 : vector<1x32x128xf32> to vector<32x128xf32>
    %c0_2 = arith.constant 0 : index
    %c0_3 = arith.constant 0 : index
    %2 = vector.load %arg2[%c0_2, %c0_3] : memref<128x128xf32, #tpu.memory_space<vmem>>, vector<128x128xf32>
    %c0_4 = arith.constant 0 : index
    %c0_5 = arith.constant 0 : index
    %3 = vector.load %arg3[%c0_4, %c0_5] : memref<256x128xf32, #tpu.memory_space<vmem>>, vector<256x128xf32>
    %c0_6 = arith.constant 0 : index
    %c0_7 = arith.constant 0 : index
    %4 = vector.load %arg4[%c0_6, %c0_7] : memref<32x256xf32, #tpu.memory_space<vmem>>, vector<32x256xf32>
    %cst = arith.constant dense<0.000000e+00> : vector<32x128xf32>
    %5 = tpu.matmul %1, %2, %cst {dimension_numbers = #tpu.dot_dimension_numbers<[1], [1], [0], [0], [0, 0, 1, 0], [], []>} : vector<32x128xf32>, vector<128x128xf32>, vector<32x128xf32> -> vector<32x128xf32>
    %6 = arith.truncf %5 : vector<32x128xf32> to vector<32x128xbf16>
    %7 = arith.truncf %3 : vector<256x128xf32> to vector<256x128xbf16>
    %8 = tpu.concatenate %6, %6, %6, %6, %6, %6, %6, %6 in 0 : vector<32x128xbf16>, vector<32x128xbf16>, vector<32x128xbf16>, vector<32x128xbf16>, vector<32x128xbf16>, vector<32x128xbf16>, vector<32x128xbf16>, vector<32x128xbf16> -> vector<256x128xbf16>
    %9 = arith.mulf %8, %7 : vector<256x128xbf16>
    %cst_8 = arith.constant dense<0.000000e+00> : vector<32x256xf32>
    %10 = tpu.matmul %6, %9, %cst_8 {dimension_numbers = #tpu.dot_dimension_numbers<[1], [1], [0], [0], [0, 0, 1, 0], [], []>} : vector<32x128xbf16>, vector<256x128xbf16>, vector<32x256xf32> -> vector<32x256xf32>
    %11 = arith.mulf %5, %5 : vector<32x128xf32>
    %cst_9 = arith.constant dense<0.000000e+00> : vector<32x256xf32>
    %12 = tpu.matmul %11, %3, %cst_9 {dimension_numbers = #tpu.dot_dimension_numbers<[1], [1], [0], [0], [0, 0, 1, 0], [], []>} : vector<32x128xf32>, vector<256x128xf32>, vector<32x256xf32> -> vector<32x256xf32>
    %13 = math.rsqrt %12 : vector<32x256xf32>
    %14 = arith.mulf %13, %4 : vector<32x256xf32>
    %cst_10 = arith.constant dense<0.000000e+00> : vector<256xf32>
    %15 = vector.multi_reduction <add>, %14, %cst_10 [0] : vector<32x256xf32> to vector<256xf32>
    %16 = vector.shape_cast %15 : vector<256xf32> to vector<1x256xf32>
    %17 = arith.mulf %10, %13 : vector<32x256xf32>
    %18 = vector.broadcast %16 : vector<1x256xf32> to vector<32x256xf32>
    %19 = arith.mulf %17, %18 : vector<32x256xf32>
    %cst_11 = arith.constant 2.500000e+01 : f32
    %20 = vector.broadcast %cst_11 : f32 to vector<32x256xf32>
    %21 = arith.mulf %19, %20 : vector<32x256xf32>
    %cst_12 = arith.constant dense<0xFF800000> : vector<32xf32>
    %22 = vector.multi_reduction <maximumf>, %21, %cst_12 [1] : vector<32x256xf32> to vector<32xf32>
    %23 = vector.shape_cast %22 : vector<32xf32> to vector<32x1xf32>
    %24 = vector.broadcast %23 : vector<32x1xf32> to vector<32x256xf32>
    %25 = arith.subf %21, %24 : vector<32x256xf32>
    %26 = math.exp %25 : vector<32x256xf32>
    %27 = arith.truncf %26 : vector<32x256xf32> to vector<32x256xbf16>
    %cst_13 = arith.constant dense<0.000000e+00> : vector<32x128xf32>
    %28 = tpu.matmul %27, %7, %cst_13 {dimension_numbers = #tpu.dot_dimension_numbers<[1], [0], [0], [1], [0, 0, 1, 1], [], []>} : vector<32x256xbf16>, vector<256x128xbf16>, vector<32x128xf32> -> vector<32x128xf32>
    %cst_14 = arith.constant dense<0.000000e+00> : vector<32x128xf32>
    %29 = tpu.matmul %27, %9, %cst_14 {dimension_numbers = #tpu.dot_dimension_numbers<[1], [0], [0], [1], [0, 0, 1, 1], [], []>} : vector<32x256xbf16>, vector<256x128xbf16>, vector<32x128xf32> -> vector<32x128xf32>
    %30 = tpu.reciprocal %28 {approx = true} : vector<32x128xf32> -> vector<32x128xf32>
    %31 = arith.mulf %29, %30 : vector<32x128xf32>
    %c0_15 = arith.constant 0 : index
    %c0_16 = arith.constant 0 : index
    %c0_17 = arith.constant 0 : index
    %32 = vector.load %arg5[%c0_15, %c0_16, %c0_17] : memref<1x32x256xf32, #tpu.memory_space<vmem>>, vector<1x32x128xf32>
    %33 = vector.shape_cast %32 : vector<1x32x128xf32> to vector<32x128xf32>
    %34 = vector.shape_cast %31 : vector<32x128xf32> to vector<1x32x128xf32>
    tpu.vector_store %arg5[%c0_15, %c0_16, %c0_17], %34 {strides = array<i32>} : memref<1x32x256xf32, #tpu.memory_space<vmem>>, vector<1x32x128xf32>,
    %c0_18 = arith.constant 0 : index
    %c0_19 = arith.constant 0 : index
    %c128 = arith.constant 128 : index
    %35 = vector.load %arg5[%c0_18, %c0_19, %c128] : memref<1x32x256xf32, #tpu.memory_space<vmem>>, vector<1x32x128xf32>
    %36 = vector.shape_cast %35 : vector<1x32x128xf32> to vector<32x128xf32>
    %37 = vector.shape_cast %5 : vector<32x128xf32> to vector<1x32x128xf32>
    tpu.vector_store %arg5[%c0_18, %c0_19, %c128], %37 {strides = array<i32>} : memref<1x32x256xf32, #tpu.memory_space<vmem>>, vector<1x32x128xf32>,
    %c0_i32 = arith.constant 0 : i32
    %38 = arith.cmpi eq, %arg0, %c0_i32 : i32
    %39 = arith.extui %38 : i1 to i32
    %c0_i32_20 = arith.constant 0 : i32
    %40 = arith.cmpi ne, %39, %c0_i32_20 : i32
    scf.if %40 {
      %cst_23 = arith.constant dense<0.000000e+00> : vector<32x32xf32>
      %44 = tpu.matmul %19, %4, %cst_23 {dimension_numbers = #tpu.dot_dimension_numbers<[1], [1], [0], [0], [0, 0, 1, 0], [], []>} : vector<32x256xf32>, vector<32x256xf32>, vector<32x32xf32> -> vector<32x32xf32>
      %cst_24 = arith.constant 1.250000e-01 : f32
      %45 = vector.broadcast %cst_24 : f32 to vector<32x32xf32>
      %46 = arith.mulf %44, %45 : vector<32x32xf32>
      %cst_25 = arith.constant dense<0.000000e+00> : vector<32x256xf32>
      %47 = tpu.matmul %28, %3, %cst_25 {dimension_numbers = #tpu.dot_dimension_numbers<[1], [1], [0], [0], [0, 0, 1, 0], [], []>} : vector<32x128xf32>, vector<256x128xf32>, vector<32x256xf32> -> vector<32x256xf32>
      %cst_26 = arith.constant 6.250000e-02 : f32
      %48 = vector.broadcast %cst_26 : f32 to vector<32x256xf32>
      %49 = arith.mulf %47, %48 : vector<32x256xf32>
      %50 = tpu.reciprocal %49 {approx = true} : vector<32x256xf32> -> vector<32x256xf32>
      %51 = arith.mulf %26, %50 : vector<32x256xf32>
      %cst_27 = arith.constant dense<0.000000e+00> : vector<32x32xf32>
      %52 = tpu.matmul %51, %4, %cst_27 {dimension_numbers = #tpu.dot_dimension_numbers<[1], [1], [0], [0], [0, 0, 1, 0], [], []>} : vector<32x256xf32>, vector<32x256xf32>, vector<32x32xf32> -> vector<32x32xf32>
      %cst_28 = arith.constant 1.250000e-01 : f32
      %53 = vector.broadcast %cst_28 : f32 to vector<32x32xf32>
      %54 = arith.mulf %52, %53 : vector<32x32xf32>
      %cst_29 = arith.constant dense<0xFF800000> : vector<32xf32>
      %55 = vector.multi_reduction <maximumf>, %54, %cst_29 [1] : vector<32x32xf32> to vector<32xf32>
      %56 = vector.shape_cast %55 : vector<32xf32> to vector<32x1xf32>
      %57 = vector.broadcast %56 : vector<32x1xf32> to vector<32x32xf32>
      %58 = arith.subf %54, %57 : vector<32x32xf32>
      %59 = math.exp %58 : vector<32x32xf32>
      %cst_30 = arith.constant dense<0.000000e+00> : vector<32xf32>
      %60 = vector.multi_reduction <add>, %59, %cst_30 [1] : vector<32x32xf32> to vector<32xf32>
      %61 = vector.shape_cast %60 : vector<32xf32> to vector<32x1xf32>
      %62 = tpu.reciprocal %61 {approx = true} : vector<32x1xf32> -> vector<32x1xf32>
      %63 = vector.broadcast %62 : vector<32x1xf32> to vector<32x32xf32>
      %64 = arith.mulf %59, %63 : vector<32x32xf32>
      %cst_31 = arith.constant 7.500000e-01 : f32
      %65 = vector.broadcast %cst_31 : f32 to vector<32x32xf32>
      %66 = arith.cmpf ogt, %46, %65 : vector<32x32xf32>
      %cst_32 = arith.constant 1.000000e+00 : f32
      %cst_33 = arith.constant 0.000000e+00 : f32
      %67 = vector.broadcast %cst_32 : f32 to vector<32x32xf32>
      %68 = vector.broadcast %cst_33 : f32 to vector<32x32xf32>
      %69 = arith.select %66, %67, %68 : vector<32x32xi1>, vector<32x32xf32>
      %70 = arith.mulf %69, %64 : vector<32x32xf32>
      %cst_34 = arith.constant dense<0.000000e+00> : vector<32xf32>
      %71 = vector.multi_reduction <add>, %70, %cst_34 [1] : vector<32x32xf32> to vector<32xf32>
      %72 = vector.shape_cast %71 : vector<32xf32> to vector<32x1xf32>
      %73 = tpu.reciprocal %72 {approx = true} : vector<32x1xf32> -> vector<32x1xf32>
      %74 = vector.broadcast %73 : vector<32x1xf32> to vector<32x32xf32>
      %75 = arith.mulf %70, %74 : vector<32x32xf32>
      %c0_35 = arith.constant 0 : index
      %c0_36 = arith.constant 0 : index
      %c0_37 = arith.constant 0 : index
      %76 = vector.load %arg6[%c0_35, %c0_36, %c0_37] : memref<1x32x32xf32, #tpu.memory_space<vmem>>, vector<1x32x32xf32>
      %77 = vector.shape_cast %76 : vector<1x32x32xf32> to vector<32x32xf32>
      %78 = vector.shape_cast %75 : vector<32x32xf32> to vector<1x32x32xf32>
      tpu.vector_store %arg6[%c0_35, %c0_36, %c0_37], %78 {strides = array<i32>} : memref<1x32x32xf32, #tpu.memory_space<vmem>>, vector<1x32x32xf32>,
    } else {
    }
    %c0_i32_21 = arith.constant 0 : i32
    %41 = arith.cmpi ne, %arg0, %c0_i32_21 : i32
    %42 = arith.extui %41 : i1 to i32
    %c0_i32_22 = arith.constant 0 : i32
    %43 = arith.cmpi ne, %42, %c0_i32_22 : i32
    scf.if %43 {
      %cst_23 = arith.constant 0.000000e+00 : f32
      %44 = vector.broadcast %cst_23 : f32 to vector<1x32x32xf32>
      %c0_24 = arith.constant 0 : index
      %c0_25 = arith.constant 0 : index
      %c0_26 = arith.constant 0 : index
      %45 = vector.load %arg6[%c0_24, %c0_25, %c0_26] : memref<1x32x32xf32, #tpu.memory_space<vmem>>, vector<1x32x32xf32>
      tpu.vector_store %arg6[%c0_24, %c0_25, %c0_26], %44 {strides = array<i32>} : memref<1x32x32xf32, #tpu.memory_space<vmem>>, vector<1x32x32xf32>,
    } else {
    }
    return
  }
  func.func @transform_0(%arg0: i32) -> (i32, i32, i32) {
    %c0_i32 = arith.constant 0 : i32
    %c0_i32_0 = arith.constant 0 : i32
    %c0_i32_1 = arith.constant 0 : i32
    return %arg0, %c0_i32, %c0_i32_0 : i32, i32, i32
  }
  func.func @transform_1(%arg0: i32) -> (i32, i32) {
    %c0_i32 = arith.constant 0 : i32
    %c0_i32_0 = arith.constant 0 : i32
    %c0_i32_1 = arith.constant 0 : i32
    return %c0_i32, %c0_i32_0 : i32, i32
  }
  func.func @transform_2(%arg0: i32) -> (i32, i32) {
    %c0_i32 = arith.constant 0 : i32
    %c0_i32_0 = arith.constant 0 : i32
    %c0_i32_1 = arith.constant 0 : i32
    return %c0_i32, %c0_i32_0 : i32, i32
  }
  func.func @transform_3(%arg0: i32) -> (i32, i32) {
    %c0_i32 = arith.constant 0 : i32
    %c0_i32_0 = arith.constant 0 : i32
    %c0_i32_1 = arith.constant 0 : i32
    return %c0_i32, %c0_i32_0 : i32, i32
  }
  func.func @transform_4(%arg0: i32) -> (i32, i32, i32) {
    %c0_i32 = arith.constant 0 : i32
    %c0_i32_0 = arith.constant 0 : i32
    %c0_i32_1 = arith.constant 0 : i32
    return %arg0, %c0_i32, %c0_i32_0 : i32, i32, i32
  }
  func.func @transform_5(%arg0: i32) -> (i32, i32, i32) {
    %c0_i32 = arith.constant 0 : i32
    %c0_i32_0 = arith.constant 0 : i32
    %c0_i32_1 = arith.constant 0 : i32
    return %arg0, %c0_i32, %c0_i32_0 : i32, i32, i32
  }
}

</mosaic_0001>

<llo_original>
// kernel: tpu_custom_call.1
$region0: #{tpu_custom_call.1}
  #allocation0 [shape = 'u32[]', space=smem, size = 0x4, offset = 0x4, fixed_abs, tag = 'smem constant byte address 0x4 - core index']
  #allocation1 [shape = 'u32[72,128]{1,0:T(1,128)}', space=vmem, size = 0x9000, scoped, tag = 'internal scratch']
  %s0 = inlined_call_operand.hbm [shape: f32[2,32,128], index: 0, kind: input, shape index: {}]
  %s1 = inlined_call_operand.hbm [shape: f32[128,128], index: 1, kind: input, shape index: {}]
  %s2 = inlined_call_operand.hbm [shape: f32[256,128], index: 2, kind: input, shape index: {}]
  %s3 = inlined_call_operand.hbm [shape: f32[32,256], index: 3, kind: input, shape index: {}]
  %s4 = inlined_call_operand.hbm [shape: f32[2,32,256], index: 4, kind: output, shape index: {0}]
  %s5 = inlined_call_operand.hbm [shape: f32[2,32,32], index: 5, kind: output, shape index: {1}]
  %6 = xla_tuple %s4, %s5
  %s7 = sld [smem:[#allocation0]]
  $region81: #{tpu_custom_call.1} parent=0
    _
  %s9 = ssub.s32 1, %s7
  %s10 = scalar_select 0, %s9, %s7
  $region1: #{tpu_custom_call.1} parent=0
    #allocation2 [shape = 'u8[32768]{0}', space=vmem, size = 0x8000, scoped, tag = 'input window, operand 0']
    #allocation3 [shape = 's32[2]{0}', space=sflag, size = 0x8, scoped, tag = 'scoped memory for tpu_custom_call.1']
    #allocation4 [shape = 's32[2]{0}', space=sflag, size = 0x8, scoped, tag = 'scoped memory for tpu_custom_call.1']
    #allocation5 [shape = 'u8[65536]{0}', space=vmem, size = 0x10000, scoped, tag = 'input window, operand 1, single buffered']
    #allocation6 [shape = 's32[1]{0}', space=sflag, size = 0x4, scoped, tag = 'scoped memory for tpu_custom_call.1']
    #allocation7 [shape = 'u8[131072]{0}', space=vmem, size = 0x20000, scoped, tag = 'input window, operand 2, single buffered']
    #allocation8 [shape = 'u8[32768]{0}', space=vmem, size = 0x8000, scoped, tag = 'input window, operand 3, single buffered']
    #allocation9 [shape = 's32[1]{0}', space=sflag, size = 0x4, scoped, tag = 'scoped memory for tpu_custom_call.1']
    #allocation10 [shape = 'u8[65536]{0}', space=vmem, size = 0x10000, scoped, tag = 'output window, operand 0']
    #allocation11 [shape = 'u8[32768]{0}', space=vmem, size = 0x8000, scoped, tag = 'output window, operand 1']
    #allocation12 [shape = 's32[2]{0}', space=sflag, size = 0x8, scoped, tag = 'scoped memory for tpu_custom_call.1']
    %11 = vsyncpa [#allocation3], 0
    %s12 = scalar_lea.sflag [#allocation3], 1
    %13 = vsyncpa %s12, 0
    %14 = vsyncpa [#allocation6], 0
    %15 = vsyncpa [#allocation9], 0
    %16 = vsyncpa [#allocation4], 0
    %s17 = scalar_lea.sflag [#allocation4], 1
    %18 = vsyncpa %s17, 0
    %19 = vsyncpa [#allocation12], 0
    %s20 = scalar_lea.sflag [#allocation12], 1
    %21 = vsyncpa %s20, 0
    loop: start=0, step=1, limit=4
    $region2: #{tpu_custom_call.1} parent=1 // loop_pre_header
      _
    $region3: #{tpu_custom_call.1} parent=1 // loop_header
      %s23 = sphi 0, %s27
      %p24 = scmp.ge.s32.totalorder %s23, 4
      %s33 = sphi 0, %s35
      %s36 = sphi 0, %s33
      %s37 = sphi 0, %s36
      %s53 = sphi 0, %s37
      %s57 = sphi 0, %s57
      %s59 = sphi 0, %s57
      %s60 = sphi 0, %s59
      %s74 = sphi 0, %s60
      %s78 = sphi 0, %s78
      %s80 = sphi 0, %s78
      %s81 = sphi 0, %s80
      %s95 = sphi 0, %s81
      %s99 = sphi 0, %s99
      %s101 = sphi 0, %s99
      %s102 = sphi 0, %s101
      %s116 = sphi 0, %s102
      %s122 = sphi 0, %s124
      %s125 = sphi 0, %s122
      %s126 = sphi 0, %s125
      %s142 = sphi 0, %s126
      %s148 = sphi 0, %s150
      %s151 = sphi 0, %s148
      %s152 = sphi 0, %s151
      %s168 = sphi 0, %s152
    $region4: #{tpu_custom_call.1} parent=1 // loop_header_branch
      %26 = sbr.rel (%p24) target = $region8
    $region5: #{tpu_custom_call.1} parent=1 // loop_body
      %s28 = ssub.s32 %s23, 1
      %s29 = ssub.s32 %s23, 2
      %s30 = sadd.s32 %s23, 1
      %s31 = ssub.s32 %s23, %s30
      %p32 = scmp.eq.s32.totalorder %s31, 0
      %s34 = sadd.s32 %s33, 1
      %s35 = scalar_select %p32, %s33, %s34
      %p38 = pneg %p32
      %p39 = scmp.eq.s32.totalorder %s23, 1
      %p40 = por %p38, %p39
      %p41 = scmp.ne.s32.totalorder %s33, %s36
      %p42 = scmp.eq.s32.totalorder %s23, 0
      %p43 = por %p41, %p42
      %p44 = scmp.ne.s32.totalorder %s33, %s36
      %p45 = scmp.eq.s32.totalorder %s28, 1
      %p46 = por %p44, %p45
      %p47 = scmp.ne.s32.totalorder %s36, %s37
      %p48 = scmp.eq.s32.totalorder %s28, 0
      %p49 = por %p47, %p48
      %p50 = scmp.ne.s32.totalorder %s36, %s37
      %p51 = scmp.eq.s32.totalorder %s29, 1
      %p52 = por %p50, %p51
      %p54 = scmp.ne.s32.totalorder %s37, %s53
      %p55 = scmp.eq.s32.totalorder %s29, 0
      %p56 = por %p54, %p55
      %s58 = sadd.s32 %s57, 1
      %p61 = scmp.eq.s32.totalorder %s23, 1
      %p62 = scmp.ne.s32.totalorder %s57, %s59
      %p63 = scmp.eq.s32.totalorder %s23, 0
      %p64 = por %p62, %p63
      %p65 = scmp.ne.s32.totalorder %s57, %s59
      %p66 = scmp.eq.s32.totalorder %s28, 1
      %p67 = por %p65, %p66
      %p68 = scmp.ne.s32.totalorder %s59, %s60
      %p69 = scmp.eq.s32.totalorder %s28, 0
      %p70 = por %p68, %p69
      %p71 = scmp.ne.s32.totalorder %s59, %s60
      %p72 = scmp.eq.s32.totalorder %s29, 1
      %p73 = por %p71, %p72
      %p75 = scmp.ne.s32.totalorder %s60, %s74
      %p76 = scmp.eq.s32.totalorder %s29, 0
      %p77 = por %p75, %p76
      %s79 = sadd.s32 %s78, 1
      %p82 = scmp.eq.s32.totalorder %s23, 1
      %p83 = scmp.ne.s32.totalorder %s78, %s80
      %p84 = scmp.eq.s32.totalorder %s23, 0
      %p85 = por %p83, %p84
      %p86 = scmp.ne.s32.totalorder %s78, %s80
      %p87 = scmp.eq.s32.totalorder %s28, 1
      %p88 = por %p86, %p87
      %p89 = scmp.ne.s32.totalorder %s80, %s81
      %p90 = scmp.eq.s32.totalorder %s28, 0
      %p91 = por %p89, %p90
      %p92 = scmp.ne.s32.totalorder %s80, %s81
      %p93 = scmp.eq.s32.totalorder %s29, 1
      %p94 = por %p92, %p93
      %p96 = scmp.ne.s32.totalorder %s81, %s95
      %p97 = scmp.eq.s32.totalorder %s29, 0
      %p98 = por %p96, %p97
      %s100 = sadd.s32 %s99, 1
      %p103 = scmp.eq.s32.totalorder %s23, 1
      %p104 = scmp.ne.s32.totalorder %s99, %s101
      %p105 = scmp.eq.s32.totalorder %s23, 0
      %p106 = por %p104, %p105
      %p107 = scmp.ne.s32.totalorder %s99, %s101
      %p108 = scmp.eq.s32.totalorder %s28, 1
      %p109 = por %p107, %p108
      %p110 = scmp.ne.s32.totalorder %s101, %s102
      %p111 = scmp.eq.s32.totalorder %s28, 0
      %p112 = por %p110, %p111
      %p113 = scmp.ne.s32.totalorder %s101, %s102
      %p114 = scmp.eq.s32.totalorder %s29, 1
      %p115 = por %p113, %p114
      %p117 = scmp.ne.s32.totalorder %s102, %s116
      %p118 = scmp.eq.s32.totalorder %s29, 0
      %p119 = por %p117, %p118
      %s120 = ssub.s32 %s23, %s30
      %p121 = scmp.eq.s32.totalorder %s120, 0
      %s123 = sadd.s32 %s122, 1
      %s124 = scalar_select %p121, %s122, %s123
      %p127 = pneg %p121
      %p128 = scmp.eq.s32.totalorder %s23, 1
      %p129 = por %p127, %p128
      %p130 = scmp.ne.s32.totalorder %s122, %s125
      %p131 = scmp.eq.s32.totalorder %s23, 0
      %p132 = por %p130, %p131
      %p133 = scmp.ne.s32.totalorder %s122, %s125
      %p134 = scmp.eq.s32.totalorder %s28, 1
      %p135 = por %p133, %p134
      %p136 = scmp.ne.s32.totalorder %s125, %s126
      %p137 = scmp.eq.s32.totalorder %s28, 0
      %p138 = por %p136, %p137
      %p139 = scmp.ne.s32.totalorder %s125, %s126
      %p140 = scmp.eq.s32.totalorder %s29, 1
      %p141 = por %p139, %p140
      %p143 = scmp.ne.s32.totalorder %s126, %s142
      %p144 = scmp.eq.s32.totalorder %s29, 0
      %p145 = por %p143, %p144
      %s146 = ssub.s32 %s23, %s30
      %p147 = scmp.eq.s32.totalorder %s146, 0
      %s149 = sadd.s32 %s148, 1
      %s150 = scalar_select %p147, %s148, %s149
      %p153 = pneg %p147
      %p154 = scmp.eq.s32.totalorder %s23, 1
      %p155 = por %p153, %p154
      %p156 = scmp.ne.s32.totalorder %s148, %s151
      %p157 = scmp.eq.s32.totalorder %s23, 0
      %p158 = por %p156, %p157
      %p159 = scmp.ne.s32.totalorder %s148, %s151
      %p160 = scmp.eq.s32.totalorder %s28, 1
      %p161 = por %p159, %p160
      %p162 = scmp.ne.s32.totalorder %s151, %s152
      %p163 = scmp.eq.s32.totalorder %s28, 0
      %p164 = por %p162, %p163
      %p165 = scmp.ne.s32.totalorder %s151, %s152
      %p166 = scmp.eq.s32.totalorder %s29, 1
      %p167 = por %p165, %p166
      %p169 = scmp.ne.s32.totalorder %s152, %s168
      %p170 = scmp.eq.s32.totalorder %s29, 0
      %p171 = por %p169, %p170
      %p172 = scmp.le.s32.totalorder 1, %s23
      %p173 = scmp.lt.s32.totalorder %s23, 3
      %p174 = pnand %p172, %p173
      %p175 = pneg %p174
      // Predicated region
      $region9: #{tpu_custom_call.1} parent=5 // pred_check
        _
      $region10: #{tpu_custom_call.1} parent=5 // pred_check_branch
        %177 = sbr.rel (%p174) target = $region12
      $region11: #{tpu_custom_call.1} parent=5 // pred_region
        %s178 = ssub.s32 %s23, 1
        // Predicated region
        $region13: #{tpu_custom_call.1} parent=11 // pred_check
          %p179 = pneg %p70
        $region14: #{tpu_custom_call.1} parent=11 // pred_check_branch
          %181 = sbr.rel (%p179) target = $region16
        $region15: #{tpu_custom_call.1} parent=11 // pred_region
          %183 = vsyncadd [#allocation6], 0
          %s184 = sshll.u32 %s1, 4
          %s185 = int_to_ptr.hbm [resolvable:$true] %s184
          %s186 = sshll.u32 [#allocation5], 4
          %s187 = int_to_ptr.vmem [resolvable:$true] %s186
          %192 = dma.hbm_to_vmem [thread:$0]  %s185, 2048, %s187, [#allocation6], 128, 128, 8
        $region16: #{tpu_custom_call.1} parent=11 // pred_fallthru
          _
        // Predicated region
        $region17: #{tpu_custom_call.1} parent=11 // pred_check
          %p193 = pneg %p91
        $region18: #{tpu_custom_call.1} parent=11 // pred_check_branch
          %195 = sbr.rel (%p193) target = $region20
        $region19: #{tpu_custom_call.1} parent=11 // pred_region
          %197 = vsyncadd [#allocation6], 0
          %s198 = sshll.u32 %s2, 4
          %s199 = int_to_ptr.hbm [resolvable:$true] %s198
          %s200 = sshll.u32 [#allocation7], 4
          %s201 = int_to_ptr.vmem [resolvable:$true] %s200
          %206 = dma.hbm_to_vmem [thread:$0]  %s199, 4096, %s201, [#allocation6], 128, 128, 8
        $region20: #{tpu_custom_call.1} parent=11 // pred_fallthru
          _
        // Predicated region
        $region21: #{tpu_custom_call.1} parent=11 // pred_check
          %p207 = pneg %p112
        $region22: #{tpu_custom_call.1} parent=11 // pred_check_branch
          %209 = sbr.rel (%p207) target = $region24
        $region23: #{tpu_custom_call.1} parent=11 // pred_region
          %211 = vsyncadd [#allocation9], 0
          %s212 = sshll.u32 %s3, 4
          %s213 = int_to_ptr.hbm [resolvable:$true] %s212
          %s214 = sshll.u32 [#allocation8], 4
          %s215 = int_to_ptr.vmem [resolvable:$true] %s214
          %220 = dma.hbm_to_vmem [thread:$0]  %s213, 1024, %s215, [#allocation9], 256, 256, 16
        $region24: #{tpu_custom_call.1} parent=11 // pred_fallthru
          _
      $region12: #{tpu_custom_call.1} parent=5 // pred_fallthru
        _
      %p221 = scmp.lt.s32.totalorder %s23, 2
      // Predicated region
      $region25: #{tpu_custom_call.1} parent=5 // pred_check
        %p222 = pneg %p221
      $region26: #{tpu_custom_call.1} parent=5 // pred_check_branch
        %224 = sbr.rel (%p222) target = $region28
      $region27: #{tpu_custom_call.1} parent=5 // pred_region
        // Predicated region
        $region29: #{tpu_custom_call.1} parent=27 // pred_check
          %p225 = pneg %p43
        $region30: #{tpu_custom_call.1} parent=27 // pred_check_branch
          %227 = sbr.rel (%p225) target = $region32
        $region31: #{tpu_custom_call.1} parent=27 // pred_region
          %s228 = sand.u32 %s33, 1
          %s229 = scalar_lea.sflag [#allocation3], %s228
          %s230 = sand.u32 %s33, 1
          %s231 = smul.addr %s230, 32
          %s232 = scalar_lea.vmem [#allocation2], %s231
          %234 = vsyncadd %s229, 0
          %s235 = smul.addr %s23, 4
          %s236 = smul.addr %s235, 8
          %s237 = scalar_lea.hbm %s0, %s236
          %s238 = sshll.u32 %s237, 4
          %s239 = int_to_ptr.hbm [resolvable:$true] %s238
          %s240 = sshll.u32 %s232, 4
          %s241 = int_to_ptr.vmem [resolvable:$true] %s240
          %246 = dma.hbm_to_vmem [thread:$0]  %s239, 512, %s241, %s229, 128, 128, 8
        $region32: #{tpu_custom_call.1} parent=27 // pred_fallthru
          _
      $region28: #{tpu_custom_call.1} parent=5 // pred_fallthru
        _
      %p247 = scmp.le.s32.totalorder 1, %s23
      %p248 = scmp.lt.s32.totalorder %s23, 3
      %p249 = pnand %p247, %p248
      %p250 = pneg %p249
      // Predicated region
      $region33: #{tpu_custom_call.1} parent=5 // pred_check
        _
      $region34: #{tpu_custom_call.1} parent=5 // pred_check_branch
        %252 = sbr.rel (%p249) target = $region36
      $region35: #{tpu_custom_call.1} parent=5 // pred_region
        %s253 = ssub.s32 %s23, 1
        %s254 = sand.u32 %s36, 1
        %s255 = scalar_lea.sflag [#allocation3], %s254
        %s256 = sand.u32 %s36, 1
        %s257 = smul.addr %s256, 32
        %s258 = scalar_lea.vmem [#allocation2], %s257
        // Predicated region
        $region37: #{tpu_custom_call.1} parent=35 // pred_check
          %p259 = pneg %p49
        $region38: #{tpu_custom_call.1} parent=35 // pred_check_branch
          %261 = sbr.rel (%p259) target = $region40
        $region39: #{tpu_custom_call.1} parent=35 // pred_region
          %263 = dma.done %s255, 512
        $region40: #{tpu_custom_call.1} parent=35 // pred_fallthru
          _
        // Predicated region
        $region41: #{tpu_custom_call.1} parent=35 // pred_check
          %p264 = pneg %p70
        $region42: #{tpu_custom_call.1} parent=35 // pred_check_branch
          %266 = sbr.rel (%p264) target = $region44
        $region43: #{tpu_custom_call.1} parent=35 // pred_region
          %268 = dma.done [#allocation6], 2048
        $region44: #{tpu_custom_call.1} parent=35 // pred_fallthru
          _
        // Predicated region
        $region45: #{tpu_custom_call.1} parent=35 // pred_check
          %p269 = pneg %p91
        $region46: #{tpu_custom_call.1} parent=35 // pred_check_branch
          %271 = sbr.rel (%p269) target = $region48
        $region47: #{tpu_custom_call.1} parent=35 // pred_region
          %273 = dma.done [#allocation6], 4096
        $region48: #{tpu_custom_call.1} parent=35 // pred_fallthru
          _
        // Predicated region
        $region49: #{tpu_custom_call.1} parent=35 // pred_check
          %p274 = pneg %p112
        $region50: #{tpu_custom_call.1} parent=35 // pred_check_branch
          %276 = sbr.rel (%p274) target = $region52
        $region51: #{tpu_custom_call.1} parent=35 // pred_region
          %278 = dma.done [#allocation9], 1024
        $region52: #{tpu_custom_call.1} parent=35 // pred_fallthru
          _
        %s279 = sand.u32 %s36, 1
        %s280 = scalar_lea.sflag [#allocation3], %s279
        %s281 = sand.u32 %s36, 1
        %s282 = smul.addr %s281, 32
        %s283 = scalar_lea.vmem [#allocation2], %s282
        %p284 = pneg %p49
        %p285 = pneg %p46
        %p286 = pneg %p70
        %p287 = pneg %p67
        %p288 = pneg %p91
        %p289 = pneg %p88
        %p290 = pneg %p112
        %p291 = pneg %p109
        %p292 = pneg %p138
        %p293 = pneg %p135
        %s294 = sand.u32 %s125, 1
        %s295 = scalar_lea.sflag [#allocation4], %s294
        %s296 = sand.u32 %s125, 1
        %s297 = smul.addr %s296, 64
        %s298 = scalar_lea.vmem [#allocation10], %s297
        %p299 = pneg %p164
        %p300 = pneg %p161
        %s301 = sand.u32 %s151, 1
        %s302 = scalar_lea.sflag [#allocation12], %s301
        %s303 = sand.u32 %s151, 1
        %s304 = smul.addr %s303, 32
        %s305 = scalar_lea.vmem [#allocation11], %s304
        %v306 = vld [vmem:[%s258] sm:$0xff]
        %v307 = vld [vmem:[%s258 + $0x8] sm:$0xff]
        %v308 = vld [vmem:[%s258 + $0x10] sm:$0xff]
        %v309 = vld [vmem:[%s258 + $0x18] sm:$0xff]
        %v310 = vld [vmem:[#allocation5] sm:$0xff]
        %v311 = vld [vmem:[#allocation5 + $0x8] sm:$0xff]
        %v312 = vld [vmem:[#allocation5 + $0x10] sm:$0xff]
        %v313 = vld [vmem:[#allocation5 + $0x18] sm:$0xff]
        %v314 = vld [vmem:[#allocation5 + $0x20] sm:$0xff]
        %v315 = vld [vmem:[#allocation5 + $0x28] sm:$0xff]
        %v316 = vld [vmem:[#allocation5 + $0x30] sm:$0xff]
        %v317 = vld [vmem:[#allocation5 + $0x38] sm:$0xff]
        %v318 = vld [vmem:[#allocation5 + $0x40] sm:$0xff]
        %v319 = vld [vmem:[#allocation5 + $0x48] sm:$0xff]
        %v320 = vld [vmem:[#allocation5 + $0x50] sm:$0xff]
        %v321 = vld [vmem:[#allocation5 + $0x58] sm:$0xff]
        %v322 = vld [vmem:[#allocation5 + $0x60] sm:$0xff]
        %v323 = vld [vmem:[#allocation5 + $0x68] sm:$0xff]
        %v324 = vld [vmem:[#allocation5 + $0x70] sm:$0xff]
        %v325 = vld [vmem:[#allocation5 + $0x78] sm:$0xff]
        %v326 = vld [vmem:[#allocation7] sm:$0xff]
        %v327 = vld [vmem:[#allocation7 + $0x8] sm:$0xff]
        %v328 = vld [vmem:[#allocation7 + $0x10] sm:$0xff]
        %v329 = vld [vmem:[#allocation7 + $0x18] sm:$0xff]
        %v330 = vld [vmem:[#allocation7 + $0x20] sm:$0xff]
        %v331 = vld [vmem:[#allocation7 + $0x28] sm:$0xff]
        %v332 = vld [vmem:[#allocation7 + $0x30] sm:$0xff]
        %v333 = vld [vmem:[#allocation7 + $0x38] sm:$0xff]
        %v334 = vld [vmem:[#allocation7 + $0x40] sm:$0xff]
        %v335 = vld [vmem:[#allocation7 + $0x48] sm:$0xff]
        %v336 = vld [vmem:[#allocation7 + $0x50] sm:$0xff]
        %v337 = vld [vmem:[#allocation7 + $0x58] sm:$0xff]
        %v338 = vld [vmem:[#allocation7 + $0x60] sm:$0xff]
        %v339 = vld [vmem:[#allocation7 + $0x68] sm:$0xff]
        %v340 = vld [vmem:[#allocation7 + $0x70] sm:$0xff]
        %v341 = vld [vmem:[#allocation7 + $0x78] sm:$0xff]
        %v342 = vld [vmem:[#allocation7 + $0x80] sm:$0xff]
        %v343 = vld [vmem:[#allocation7 + $0x88] sm:$0xff]
        %v344 = vld [vmem:[#allocation7 + $0x90] sm:$0xff]
        %v345 = vld [vmem:[#allocation7 + $0x98] sm:$0xff]
        %v346 = vld [vmem:[#allocation7 + $0xa0] sm:$0xff]
        %v347 = vld [vmem:[#allocation7 + $0xa8] sm:$0xff]
        %v348 = vld [vmem:[#allocation7 + $0xb0] sm:$0xff]
        %v349 = vld [vmem:[#allocation7 + $0xb8] sm:$0xff]
        %v350 = vld [vmem:[#allocation7 + $0xc0] sm:$0xff]
        %v351 = vld [vmem:[#allocation7 + $0xc8] sm:$0xff]
        %v352 = vld [vmem:[#allocation7 + $0xd0] sm:$0xff]
        %v353 = vld [vmem:[#allocation7 + $0xd8] sm:$0xff]
        %v354 = vld [vmem:[#allocation7 + $0xe0] sm:$0xff]
        %v355 = vld [vmem:[#allocation7 + $0xe8] sm:$0xff]
        %v356 = vld [vmem:[#allocation7 + $0xf0] sm:$0xff]
        %v357 = vld [vmem:[#allocation7 + $0xf8] sm:$0xff]
        %v358 = vld [vmem:[#allocation8] sm:$0xff]
        %v359 = vld [vmem:[#allocation8 + $0x8] sm:$0xff]
        %v360 = vld [vmem:[#allocation8 + $0x10] sm:$0xff]
        %v361 = vld [vmem:[#allocation8 + $0x18] sm:$0xff]
        %v362 = vld [vmem:[#allocation8 + $0x20] sm:$0xff]
        %v363 = vld [vmem:[#allocation8 + $0x28] sm:$0xff]
        %v364 = vld [vmem:[#allocation8 + $0x30] sm:$0xff]
        %v365 = vld [vmem:[#allocation8 + $0x38] sm:$0xff]
        %366 = vmatpush.xpose.msra.mxu0 %v325
        %367 = vmatpush.xpose.msra.mxu0 %v324
        %368 = vmatpush.xpose.msra.mxu0 %v323
        %369 = vmatpush.xpose.msra.mxu0 %v322
        %370 = vmatpush.xpose.msra.mxu0 %v321
        %371 = vmatpush.xpose.msra.mxu0 %v320
        %372 = vmatpush.xpose.msra.mxu0 %v319
        %373 = vmatpush.xpose.msra.mxu0 %v318
        %374 = vmatpush.xpose.msra.mxu0 %v317
        %375 = vmatpush.xpose.msra.mxu0 %v316
        %376 = vmatpush.xpose.msra.mxu0 %v315
        %377 = vmatpush.xpose.msra.mxu0 %v314
        %378 = vmatpush.xpose.msra.mxu0 %v313
        %379 = vmatpush.xpose.msra.mxu0 %v312
        %380 = vmatpush.xpose.msra.mxu0 %v311
        %381 = vmatpush.xpose.msra.mxu0 %v310
        %382 = vmatmul.f32.gmra.mxu0 %v306
        %v383 = vpop.f32.mrf.mxu0
        %v384 = vadd.f32 0.0, %v383
        %385 = vmatmul.f32.gmra.mxu0 %v307
        %v386 = vpop.f32.mrf.mxu0
        %v387 = vadd.f32 0.0, %v386
        %388 = vmatmul.f32.gmra.mxu0 %v308
        %v389 = vpop.f32.mrf.mxu0
        %v390 = vadd.f32 0.0, %v389
        %391 = vmatmul.f32.gmra.mxu0 %v309
        %v392 = vpop.f32.mrf.mxu0
        %v393 = vadd.f32 0.0, %v392
        %394 = vdwg.mxu0
        %v395 = vpack.c.bf16 %v384, %v384
        %v396 = vpack.c.bf16 %v387, %v387
        %v397 = vpack.c.bf16 %v390, %v390
        %v398 = vpack.c.bf16 %v393, %v393
        %v399 = vpack.c.bf16 %v326, %v326
        %v400 = vpack.c.bf16 %v327, %v327
        %v401 = vpack.c.bf16 %v328, %v328
        %v402 = vpack.c.bf16 %v329, %v329
        %v403 = vpack.c.bf16 %v330, %v330
        %v404 = vpack.c.bf16 %v331, %v331
        %v405 = vpack.c.bf16 %v332, %v332
        %v406 = vpack.c.bf16 %v333, %v333
        %v407 = vpack.c.bf16 %v334, %v334
        %v408 = vpack.c.bf16 %v335, %v335
        %v409 = vpack.c.bf16 %v336, %v336
        %v410 = vpack.c.bf16 %v337, %v337
        %v411 = vpack.c.bf16 %v338, %v338
        %v412 = vpack.c.bf16 %v339, %v339
        %v413 = vpack.c.bf16 %v340, %v340
        %v414 = vpack.c.bf16 %v341, %v341
        %v415 = vpack.c.bf16 %v342, %v342
        %v416 = vpack.c.bf16 %v343, %v343
        %v417 = vpack.c.bf16 %v344, %v344
        %v418 = vpack.c.bf16 %v345, %v345
        %v419 = vpack.c.bf16 %v346, %v346
        %v420 = vpack.c.bf16 %v347, %v347
        %v421 = vpack.c.bf16 %v348, %v348
        %v422 = vpack.c.bf16 %v349, %v349
        %v423 = vpack.c.bf16 %v350, %v350
        %v424 = vpack.c.bf16 %v351, %v351
        %v425 = vpack.c.bf16 %v352, %v352
        %v426 = vpack.c.bf16 %v353, %v353
        %v427 = vpack.c.bf16 %v354, %v354
        %v428 = vpack.c.bf16 %v355, %v355
        %v429 = vpack.c.bf16 %v356, %v356
        %v430 = vpack.c.bf16 %v357, %v357
        %v435 = vunpack.c.l.b16 %v395
        %v436 = vunpack.c.l.b16 %v396
        %v437 = vunpack.c.l.b16 %v397
        %v438 = vunpack.c.l.b16 %v398
        %v439 = vpack.c.b16 %v436, %v435
        %v440 = vpack.c.b16 %v438, %v437
        %v443 = vunpack.c.l.bf16 %v439
        %v444 = vunpack.c.h.bf16 %v439
        %v445 = vunpack.c.l.bf16 %v440
        %v446 = vunpack.c.h.bf16 %v440
        %v447 = vunpack.c.l.bf16 %v399
        %v448 = vunpack.c.l.bf16 %v400
        %v449 = vunpack.c.l.bf16 %v401
        %v450 = vunpack.c.l.bf16 %v402
        %v451 = vunpack.c.l.bf16 %v403
        %v452 = vunpack.c.l.bf16 %v404
        %v453 = vunpack.c.l.bf16 %v405
        %v454 = vunpack.c.l.bf16 %v406
        %v455 = vunpack.c.l.bf16 %v407
        %v456 = vunpack.c.l.bf16 %v408
        %v457 = vunpack.c.l.bf16 %v409
        %v458 = vunpack.c.l.bf16 %v410
        %v459 = vunpack.c.l.bf16 %v411
        %v460 = vunpack.c.l.bf16 %v412
        %v461 = vunpack.c.l.bf16 %v413
        %v462 = vunpack.c.l.bf16 %v414
        %v463 = vunpack.c.l.bf16 %v415
        %v464 = vunpack.c.l.bf16 %v416
        %v465 = vunpack.c.l.bf16 %v417
        %v466 = vunpack.c.l.bf16 %v418
        %v467 = vunpack.c.l.bf16 %v419
        %v468 = vunpack.c.l.bf16 %v420
        %v469 = vunpack.c.l.bf16 %v421
        %v470 = vunpack.c.l.bf16 %v422
        %v471 = vunpack.c.l.bf16 %v423
        %v472 = vunpack.c.l.bf16 %v424
        %v473 = vunpack.c.l.bf16 %v425
        %v474 = vunpack.c.l.bf16 %v426
        %v475 = vunpack.c.l.bf16 %v427
        %v476 = vunpack.c.l.bf16 %v428
        %v477 = vunpack.c.l.bf16 %v429
        %v478 = vunpack.c.l.bf16 %v430
        %v479 = vmul.f32 %v443, %v447
        %v480 = vmul.f32 %v444, %v448
        %v481 = vmul.f32 %v445, %v449
        %v482 = vmul.f32 %v446, %v450
        %v483 = vmul.f32 %v443, %v451
        %v484 = vmul.f32 %v444, %v452
        %v485 = vmul.f32 %v445, %v453
        %v486 = vmul.f32 %v446, %v454
        %v487 = vmul.f32 %v443, %v455
        %v488 = vmul.f32 %v444, %v456
        %v489 = vmul.f32 %v445, %v457
        %v490 = vmul.f32 %v446, %v458
        %v491 = vmul.f32 %v443, %v459
        %v492 = vmul.f32 %v444, %v460
        %v493 = vmul.f32 %v445, %v461
        %v494 = vmul.f32 %v446, %v462
        %v495 = vmul.f32 %v443, %v463
        %v496 = vmul.f32 %v444, %v464
        %v497 = vmul.f32 %v445, %v465
        %v498 = vmul.f32 %v446, %v466
        %v499 = vmul.f32 %v443, %v467
        %v500 = vmul.f32 %v444, %v468
        %v501 = vmul.f32 %v445, %v469
        %v502 = vmul.f32 %v446, %v470
        %v503 = vmul.f32 %v443, %v471
        %v504 = vmul.f32 %v444, %v472
        %v505 = vmul.f32 %v445, %v473
        %v506 = vmul.f32 %v446, %v474
        %v507 = vmul.f32 %v443, %v475
        %v508 = vmul.f32 %v444, %v476
        %v509 = vmul.f32 %v445, %v477
        %v510 = vmul.f32 %v446, %v478
        %v511 = vpack.c.bf16 %v480, %v479
        %v512 = vpack.c.bf16 %v482, %v481
        %v513 = vpack.c.bf16 %v484, %v483
        %v514 = vpack.c.bf16 %v486, %v485
        %v515 = vpack.c.bf16 %v488, %v487
        %v516 = vpack.c.bf16 %v490, %v489
        %v517 = vpack.c.bf16 %v492, %v491
        %v518 = vpack.c.bf16 %v494, %v493
        %v519 = vpack.c.bf16 %v496, %v495
        %v520 = vpack.c.bf16 %v498, %v497
        %v521 = vpack.c.bf16 %v500, %v499
        %v522 = vpack.c.bf16 %v502, %v501
        %v523 = vpack.c.bf16 %v504, %v503
        %v524 = vpack.c.bf16 %v506, %v505
        %v525 = vpack.c.bf16 %v508, %v507
        %v526 = vpack.c.bf16 %v510, %v509
        %527 = vmatpush.bf16.xpose.msra.mxu0 %v518
        %528 = vmatpush.bf16.xpose.msra.mxu0 %v517
        %529 = vmatpush.bf16.xpose.msra.mxu0 %v516
        %530 = vmatpush.bf16.xpose.msra.mxu0 %v515
        %531 = vmatpush.bf16.xpose.msra.mxu0 %v514
        %532 = vmatpush.bf16.xpose.msra.mxu0 %v513
        %533 = vmatpush.bf16.xpose.msra.mxu0 %v512
        %534 = vmatpush.bf16.xpose.msra.mxu0 %v511
        %535 = vmatmul.bf16.gmra.mxu0 %v439
        %v536 = vpop.f32.mrf.mxu0
        %v537 = vadd.f32 0.0, %v536
        %v538 = vpop.f32.mrf.mxu0
        %v539 = vadd.f32 0.0, %v538
        %540 = vmatmul.bf16.gmra.mxu0 %v440
        %v541 = vpop.f32.mrf.mxu0
        %v542 = vadd.f32 0.0, %v541
        %v543 = vpop.f32.mrf.mxu0
        %v544 = vadd.f32 0.0, %v543
        %545 = vdwg.mxu0
        %546 = vmatpush.bf16.xpose.msra.mxu0 %v526
        %547 = vmatpush.bf16.xpose.msra.mxu0 %v525
        %548 = vmatpush.bf16.xpose.msra.mxu0 %v524
        %549 = vmatpush.bf16.xpose.msra.mxu0 %v523
        %550 = vmatpush.bf16.xpose.msra.mxu0 %v522
        %551 = vmatpush.bf16.xpose.msra.mxu0 %v521
        %552 = vmatpush.bf16.xpose.msra.mxu0 %v520
        %553 = vmatpush.bf16.xpose.msra.mxu0 %v519
        %554 = vmatmul.bf16.gmra.mxu0 %v439
        %v555 = vpop.f32.mrf.mxu0
        %v556 = vadd.f32 0.0, %v555
        %v557 = vpop.f32.mrf.mxu0
        %v558 = vadd.f32 0.0, %v557
        %559 = vmatmul.bf16.gmra.mxu0 %v440
        %v560 = vpop.f32.mrf.mxu0
        %v561 = vadd.f32 0.0, %v560
        %v562 = vpop.f32.mrf.mxu0
        %v563 = vadd.f32 0.0, %v562
        %564 = vdwg.mxu0
        %v565 = vmul.f32 %v384, %v384
        %v566 = vmul.f32 %v387, %v387
        %v567 = vmul.f32 %v390, %v390
        %v568 = vmul.f32 %v393, %v393
        %569 = vmatpush.xpose.msra.mxu0 %v341
        %570 = vmatpush.xpose.msra.mxu0 %v340
        %571 = vmatpush.xpose.msra.mxu0 %v339
        %572 = vmatpush.xpose.msra.mxu0 %v338
        %573 = vmatpush.xpose.msra.mxu0 %v337
        %574 = vmatpush.xpose.msra.mxu0 %v336
        %575 = vmatpush.xpose.msra.mxu0 %v335
        %576 = vmatpush.xpose.msra.mxu0 %v334
        %577 = vmatpush.xpose.msra.mxu0 %v333
        %578 = vmatpush.xpose.msra.mxu0 %v332
        %579 = vmatpush.xpose.msra.mxu0 %v331
        %580 = vmatpush.xpose.msra.mxu0 %v330
        %581 = vmatpush.xpose.msra.mxu0 %v329
        %582 = vmatpush.xpose.msra.mxu0 %v328
        %583 = vmatpush.xpose.msra.mxu0 %v327
        %584 = vmatpush.xpose.msra.mxu0 %v326
        %585 = vmatmul.f32.gmra.mxu0 %v565
        %v586 = vpop.f32.mrf.mxu0
        %v587 = vadd.f32 0.0, %v586
        %588 = vmatmul.f32.gmra.mxu0 %v566
        %v589 = vpop.f32.mrf.mxu0
        %v590 = vadd.f32 0.0, %v589
        %591 = vmatmul.f32.gmra.mxu0 %v567
        %v592 = vpop.f32.mrf.mxu0
        %v593 = vadd.f32 0.0, %v592
        %594 = vmatmul.f32.gmra.mxu0 %v568
        %v595 = vpop.f32.mrf.mxu0
        %v596 = vadd.f32 0.0, %v595
        %597 = vdwg.mxu0
        %598 = vmatpush.xpose.msra.mxu0 %v357
        %599 = vmatpush.xpose.msra.mxu0 %v356
        %600 = vmatpush.xpose.msra.mxu0 %v355
        %601 = vmatpush.xpose.msra.mxu0 %v354
        %602 = vmatpush.xpose.msra.mxu0 %v353
        %603 = vmatpush.xpose.msra.mxu0 %v352
        %604 = vmatpush.xpose.msra.mxu0 %v351
        %605 = vmatpush.xpose.msra.mxu0 %v350
        %606 = vmatpush.xpose.msra.mxu0 %v349
        %607 = vmatpush.xpose.msra.mxu0 %v348
        %608 = vmatpush.xpose.msra.mxu0 %v347
        %609 = vmatpush.xpose.msra.mxu0 %v346
        %610 = vmatpush.xpose.msra.mxu0 %v345
        %611 = vmatpush.xpose.msra.mxu0 %v344
        %612 = vmatpush.xpose.msra.mxu0 %v343
        %613 = vmatpush.xpose.msra.mxu0 %v342
        %614 = vmatmul.f32.gmra.mxu0 %v565
        %v615 = vpop.f32.mrf.mxu0
        %v616 = vadd.f32 0.0, %v615
        %617 = vmatmul.f32.gmra.mxu0 %v566
        %v618 = vpop.f32.mrf.mxu0
        %v619 = vadd.f32 0.0, %v618
        %620 = vmatmul.f32.gmra.mxu0 %v567
        %v621 = vpop.f32.mrf.mxu0
        %v622 = vadd.f32 0.0, %v621
        %623 = vmatmul.f32.gmra.mxu0 %v568
        %v624 = vpop.f32.mrf.mxu0
        %v625 = vadd.f32 0.0, %v624
        %626 = vdwg.mxu0
        %v627 = vrsqrt.pop %v587
        %v628 = vmul.f32 %v627, %v587
        %v629 = vmul.f32 %v628, %v627
        %v630 = vmul.f32 0.5, %v629
        %v631 = vsub.f32 1.5, %v630
        %v632 = vmul.f32 %v627, %v631
        %vm633 = vweird.f32 %v587
        %vm634 = vweird.f32 %v627
        %vm635 = vmor %vm633, %vm634
        %v636 = vsel %vm635, %v627, %v632
        %v637 = vrsqrt.pop %v616
        %v638 = vmul.f32 %v637, %v616
        %v639 = vmul.f32 %v638, %v637
        %v640 = vmul.f32 0.5, %v639
        %v641 = vsub.f32 1.5, %v640
        %v642 = vmul.f32 %v637, %v641
        %vm643 = vweird.f32 %v616
        %vm644 = vweird.f32 %v637
        %vm645 = vmor %vm643, %vm644
        %v646 = vsel %vm645, %v637, %v642
        %v647 = vrsqrt.pop %v590
        %v648 = vmul.f32 %v647, %v590
        %v649 = vmul.f32 %v648, %v647
        %v650 = vmul.f32 0.5, %v649
        %v651 = vsub.f32 1.5, %v650
        %v652 = vmul.f32 %v647, %v651
        %vm653 = vweird.f32 %v590
        %vm654 = vweird.f32 %v647
        %vm655 = vmor %vm653, %vm654
        %v656 = vsel %vm655, %v647, %v652
        %v657 = vrsqrt.pop %v619
        %v658 = vmul.f32 %v657, %v619
        %v659 = vmul.f32 %v658, %v657
        %v660 = vmul.f32 0.5, %v659
        %v661 = vsub.f32 1.5, %v660
        %v662 = vmul.f32 %v657, %v661
        %vm663 = vweird.f32 %v619
        %vm664 = vweird.f32 %v657
        %vm665 = vmor %vm663, %vm664
        %v666 = vsel %vm665, %v657, %v662
        %v667 = vrsqrt.pop %v593
        %v668 = vmul.f32 %v667, %v593
        %v669 = vmul.f32 %v668, %v667
        %v670 = vmul.f32 0.5, %v669
        %v671 = vsub.f32 1.5, %v670
        %v672 = vmul.f32 %v667, %v671
        %vm673 = vweird.f32 %v593
        %vm674 = vweird.f32 %v667
        %vm675 = vmor %vm673, %vm674
        %v676 = vsel %vm675, %v667, %v672
        %v677 = vrsqrt.pop %v622
        %v678 = vmul.f32 %v677, %v622
        %v679 = vmul.f32 %v678, %v677
        %v680 = vmul.f32 0.5, %v679
        %v681 = vsub.f32 1.5, %v680
        %v682 = vmul.f32 %v677, %v681
        %vm683 = vweird.f32 %v622
        %vm684 = vweird.f32 %v677
        %vm685 = vmor %vm683, %vm684
        %v686 = vsel %vm685, %v677, %v682
        %v687 = vrsqrt.pop %v596
        %v688 = vmul.f32 %v687, %v596
        %v689 = vmul.f32 %v688, %v687
        %v690 = vmul.f32 0.5, %v689
        %v691 = vsub.f32 1.5, %v690
        %v692 = vmul.f32 %v687, %v691
        %vm693 = vweird.f32 %v596
        %vm694 = vweird.f32 %v687
        %vm695 = vmor %vm693, %vm694
        %v696 = vsel %vm695, %v687, %v692
        %v697 = vrsqrt.pop %v625
        %v698 = vmul.f32 %v697, %v625
        %v699 = vmul.f32 %v698, %v697
        %v700 = vmul.f32 0.5, %v699
        %v701 = vsub.f32 1.5, %v700
        %v702 = vmul.f32 %v697, %v701
        %vm703 = vweird.f32 %v625
        %vm704 = vweird.f32 %v697
        %vm705 = vmor %vm703, %vm704
        %v706 = vsel %vm705, %v697, %v702
        %v707 = vmul.f32 %v636, %v358
        %v708 = vmul.f32 %v646, %v359
        %v709 = vmul.f32 %v656, %v360
        %v710 = vmul.f32 %v666, %v361
        %v711 = vmul.f32 %v676, %v362
        %v712 = vmul.f32 %v686, %v363
        %v713 = vmul.f32 %v696, %v364
        %v714 = vmul.f32 %v706, %v365
        %v715 = vadd.f32 %v707, %v709
        %v716 = vadd.f32 %v715, %v711
        %v717 = vadd.f32 %v716, %v713
        %v718 = vrot.slane %v717, 4
        %v719 = vadd.f32 %v717, %v718
        %v720 = vrot.slane %v719, 2
        %v721 = vadd.f32 %v719, %v720
        %v722 = vrot.slane %v721, 1
        %v723 = vadd.f32 %v721, %v722
        %v724 = vadd.f32 %v708, %v710
        %v725 = vadd.f32 %v724, %v712
        %v726 = vadd.f32 %v725, %v714
        %v727 = vrot.slane %v726, 4
        %v728 = vadd.f32 %v726, %v727
        %v729 = vrot.slane %v728, 2
        %v730 = vadd.f32 %v728, %v729
        %v731 = vrot.slane %v730, 1
        %v732 = vadd.f32 %v730, %v731
        %v733 = vmul.f32 %v537, %v636
        %v734 = vmul.f32 %v556, %v646
        %v735 = vmul.f32 %v539, %v656
        %v736 = vmul.f32 %v558, %v666
        %v737 = vmul.f32 %v542, %v676
        %v738 = vmul.f32 %v561, %v686
        %v739 = vmul.f32 %v544, %v696
        %v740 = vmul.f32 %v563, %v706
        %v741 = vmul.f32 %v733, %v723
        %v742 = vmul.f32 %v734, %v732
        %v743 = vmul.f32 %v735, %v723
        %v744 = vmul.f32 %v736, %v732
        %v745 = vmul.f32 %v737, %v723
        %v746 = vmul.f32 %v738, %v732
        %v747 = vmul.f32 %v739, %v723
        %v748 = vmul.f32 %v740, %v732
        %v749 = vmul.f32 %v741, 25.0
        %v750 = vmul.f32 %v742, 25.0
        %v751 = vmul.f32 %v743, 25.0
        %v752 = vmul.f32 %v744, 25.0
        %v753 = vmul.f32 %v745, 25.0
        %v754 = vmul.f32 %v746, 25.0
        %v755 = vmul.f32 %v747, 25.0
        %v756 = vmul.f32 %v748, 25.0
        %v757 = vmax.f32 %v749, %v750
        %758 = vmax.xlane.f32.xlu0 %v757
        %v759 = vpop.xlane.xlu0 %758
        %v760 = vmax.f32 %v751, %v752
        %761 = vmax.xlane.f32.xlu0 %v760
        %v762 = vpop.xlane.xlu0 %761
        %v763 = vmax.f32 %v753, %v754
        %764 = vmax.xlane.f32.xlu0 %v763
        %v765 = vpop.xlane.xlu0 %764
        %v766 = vmax.f32 %v755, %v756
        %767 = vmax.xlane.f32.xlu0 %v766
        %v768 = vpop.xlane.xlu0 %767
        %v769 = vsub.f32 %v749, %v759
        %v770 = vsub.f32 %v750, %v759
        %v771 = vsub.f32 %v751, %v762
        %v772 = vsub.f32 %v752, %v762
        %v773 = vsub.f32 %v753, %v765
        %v774 = vsub.f32 %v754, %v765
        %v775 = vsub.f32 %v755, %v768
        %v776 = vsub.f32 %v756, %v768
        %v777 = vmul.f32 %v769, 1.442695
        %v778 = vpow.pop %v777
        %v779 = vmul.f32 %v770, 1.442695
        %v780 = vpow.pop %v779
        %v781 = vmul.f32 %v771, 1.442695
        %v782 = vpow.pop %v781
        %v783 = vmul.f32 %v772, 1.442695
        %v784 = vpow.pop %v783
        %v785 = vmul.f32 %v773, 1.442695
        %v786 = vpow.pop %v785
        %v787 = vmul.f32 %v774, 1.442695
        %v788 = vpow.pop %v787
        %v789 = vmul.f32 %v775, 1.442695
        %v790 = vpow.pop %v789
        %v791 = vmul.f32 %v776, 1.442695
        %v792 = vpow.pop %v791
        %v793 = vpack.c.bf16 %v782, %v778
        %v794 = vpack.c.bf16 %v784, %v780
        %v795 = vpack.c.bf16 %v790, %v786
        %v796 = vpack.c.bf16 %v792, %v788
        %v829 = vunpack.c.l.b16 %v399
        %v830 = vunpack.c.l.b16 %v400
        %v831 = vunpack.c.l.b16 %v401
        %v832 = vunpack.c.l.b16 %v402
        %v833 = vunpack.c.l.b16 %v403
        %v834 = vunpack.c.l.b16 %v404
        %v835 = vunpack.c.l.b16 %v405
        %v836 = vunpack.c.l.b16 %v406
        %v837 = vunpack.c.l.b16 %v407
        %v838 = vunpack.c.l.b16 %v408
        %v839 = vunpack.c.l.b16 %v409
        %v840 = vunpack.c.l.b16 %v410
        %v841 = vunpack.c.l.b16 %v411
        %v842 = vunpack.c.l.b16 %v412
        %v843 = vunpack.c.l.b16 %v413
        %v844 = vunpack.c.l.b16 %v414
        %v845 = vunpack.c.l.b16 %v415
        %v846 = vunpack.c.l.b16 %v416
        %v847 = vunpack.c.l.b16 %v417
        %v848 = vunpack.c.l.b16 %v418
        %v849 = vunpack.c.l.b16 %v419
        %v850 = vunpack.c.l.b16 %v420
        %v851 = vunpack.c.l.b16 %v421
        %v852 = vunpack.c.l.b16 %v422
        %v853 = vunpack.c.l.b16 %v423
        %v854 = vunpack.c.l.b16 %v424
        %v855 = vunpack.c.l.b16 %v425
        %v856 = vunpack.c.l.b16 %v426
        %v857 = vunpack.c.l.b16 %v427
        %v858 = vunpack.c.l.b16 %v428
        %v859 = vunpack.c.l.b16 %v429
        %v860 = vunpack.c.l.b16 %v430
        %v861 = vpack.c.b16 %v830, %v829
        %v862 = vpack.c.b16 %v832, %v831
        %v863 = vpack.c.b16 %v834, %v833
        %v864 = vpack.c.b16 %v836, %v835
        %v865 = vpack.c.b16 %v838, %v837
        %v866 = vpack.c.b16 %v840, %v839
        %v867 = vpack.c.b16 %v842, %v841
        %v868 = vpack.c.b16 %v844, %v843
        %v869 = vpack.c.b16 %v846, %v845
        %v870 = vpack.c.b16 %v848, %v847
        %v871 = vpack.c.b16 %v850, %v849
        %v872 = vpack.c.b16 %v852, %v851
        %v873 = vpack.c.b16 %v854, %v853
        %v874 = vpack.c.b16 %v856, %v855
        %v875 = vpack.c.b16 %v858, %v857
        %v876 = vpack.c.b16 %v860, %v859
        %893 = vmatpush.bf16.msra.mxu0 %v868
        %894 = vmatpush.bf16.msra.mxu0 %v867
        %895 = vmatpush.bf16.msra.mxu0 %v866
        %896 = vmatpush.bf16.msra.mxu0 %v865
        %897 = vmatpush.bf16.msra.mxu0 %v864
        %898 = vmatpush.bf16.msra.mxu0 %v863
        %899 = vmatpush.bf16.msra.mxu0 %v862
        %900 = vmatpush.bf16.msra.mxu0 %v861
        %901 = vmatmul.bf16.gmra.mxu0 %v793
        %v902 = vpop.f32.mrf.mxu0
        %v903 = vadd.f32 0.0, %v902
        %v904 = vpop.f32.mrf.mxu0
        %v905 = vadd.f32 0.0, %v904
        %906 = vmatmul.bf16.gmra.mxu0 %v795
        %v907 = vpop.f32.mrf.mxu0
        %v908 = vadd.f32 0.0, %v907
        %v909 = vpop.f32.mrf.mxu0
        %v910 = vadd.f32 0.0, %v909
        %911 = vdwg.mxu0
        %912 = vmatpush.bf16.msra.mxu0 %v876
        %913 = vmatpush.bf16.msra.mxu0 %v875
        %914 = vmatpush.bf16.msra.mxu0 %v874
        %915 = vmatpush.bf16.msra.mxu0 %v873
        %916 = vmatpush.bf16.msra.mxu0 %v872
        %917 = vmatpush.bf16.msra.mxu0 %v871
        %918 = vmatpush.bf16.msra.mxu0 %v870
        %919 = vmatpush.bf16.msra.mxu0 %v869
        %920 = vmatmul.bf16.gmra.mxu0 %v794
        %v921 = vpop.f32.mrf.mxu0
        %v922 = vadd.f32 %v903, %v921
        %v923 = vpop.f32.mrf.mxu0
        %v924 = vadd.f32 %v905, %v923
        %925 = vmatmul.bf16.gmra.mxu0 %v796
        %v926 = vpop.f32.mrf.mxu0
        %v927 = vadd.f32 %v908, %v926
        %v928 = vpop.f32.mrf.mxu0
        %v929 = vadd.f32 %v910, %v928
        %930 = vdwg.mxu0
        %931 = vmatpush.bf16.msra.mxu0 %v518
        %932 = vmatpush.bf16.msra.mxu0 %v517
        %933 = vmatpush.bf16.msra.mxu0 %v516
        %934 = vmatpush.bf16.msra.mxu0 %v515
        %935 = vmatpush.bf16.msra.mxu0 %v514
        %936 = vmatpush.bf16.msra.mxu0 %v513
        %937 = vmatpush.bf16.msra.mxu0 %v512
        %938 = vmatpush.bf16.msra.mxu0 %v511
        %939 = vmatmul.bf16.gmra.mxu0 %v793
        %v940 = vpop.f32.mrf.mxu0
        %v941 = vadd.f32 0.0, %v940
        %v942 = vpop.f32.mrf.mxu0
        %v943 = vadd.f32 0.0, %v942
        %944 = vmatmul.bf16.gmra.mxu0 %v795
        %v945 = vpop.f32.mrf.mxu0
        %v946 = vadd.f32 0.0, %v945
        %v947 = vpop.f32.mrf.mxu0
        %v948 = vadd.f32 0.0, %v947
        %949 = vdwg.mxu0
        %950 = vmatpush.bf16.msra.mxu0 %v526
        %951 = vmatpush.bf16.msra.mxu0 %v525
        %952 = vmatpush.bf16.msra.mxu0 %v524
        %953 = vmatpush.bf16.msra.mxu0 %v523
        %954 = vmatpush.bf16.msra.mxu0 %v522
        %955 = vmatpush.bf16.msra.mxu0 %v521
        %956 = vmatpush.bf16.msra.mxu0 %v520
        %957 = vmatpush.bf16.msra.mxu0 %v519
        %958 = vmatmul.bf16.gmra.mxu0 %v794
        %v959 = vpop.f32.mrf.mxu0
        %v960 = vadd.f32 %v941, %v959
        %v961 = vpop.f32.mrf.mxu0
        %v962 = vadd.f32 %v943, %v961
        %963 = vmatmul.bf16.gmra.mxu0 %v796
        %v964 = vpop.f32.mrf.mxu0
        %v965 = vadd.f32 %v946, %v964
        %v966 = vpop.f32.mrf.mxu0
        %v967 = vadd.f32 %v948, %v966
        %968 = vdwg.mxu0
        %v969 = vrcp.pop %v922
        %v970 = vrcp.pop %v924
        %v971 = vrcp.pop %v927
        %v972 = vrcp.pop %v929
        %v973 = vmul.f32 %v960, %v969
        %v974 = vmul.f32 %v962, %v970
        %v975 = vmul.f32 %v965, %v971
        %v976 = vmul.f32 %v967, %v972
        %977 = vst [vmem:[%s298] sm:$0xff] %v973
        %978 = vst [vmem:[%s298 + $0x10] sm:$0xff] %v974
        %979 = vst [vmem:[%s298 + $0x20] sm:$0xff] %v975
        %980 = vst [vmem:[%s298 + $0x30] sm:$0xff] %v976
        %981 = vst [vmem:[%s298 + $0x8] sm:$0xff] %v384
        %982 = vst [vmem:[%s298 + $0x18] sm:$0xff] %v387
        %983 = vst [vmem:[%s298 + $0x28] sm:$0xff] %v390
        %984 = vst [vmem:[%s298 + $0x38] sm:$0xff] %v393
        %p985 = scmp.eq.s32.totalorder %s28, 0
        // Predicated region
        $region53: #{tpu_custom_call.1} parent=35 // pred_check
          %p986 = pneg %p985
        $region54: #{tpu_custom_call.1} parent=35 // pred_check_branch
          %988 = sbr.rel (%p986) target = $region56
        $region55: #{tpu_custom_call.1} parent=35 // pred_region
          %989 = vmatpush.xpose.msra.mxu0 0.0
          %990 = vmatpush.xpose.msra.mxu0 0.0
          %991 = vmatpush.xpose.msra.mxu0 0.0
          %992 = vmatpush.xpose.msra.mxu0 0.0
          %993 = vmatpush.xpose.msra.mxu0 0.0
          %994 = vmatpush.xpose.msra.mxu0 0.0
          %995 = vmatpush.xpose.msra.mxu0 0.0
          %996 = vmatpush.xpose.msra.mxu0 0.0
          %997 = vmatpush.xpose.msra.mxu0 0.0
          %998 = vmatpush.xpose.msra.mxu0 0.0
          %999 = vmatpush.xpose.msra.mxu0 0.0
          %1000 = vmatpush.xpose.msra.mxu0 0.0
          %1001 = vmatpush.xpose.msra.mxu0 %v364
          %1002 = vmatpush.xpose.msra.mxu0 %v362
          %1003 = vmatpush.xpose.msra.mxu0 %v360
          %1004 = vmatpush.xpose.msra.mxu0 %v358
          %1005 = vmatmul.f32.gmra.mxu0 %v741
          %v1006 = vpop.f32.mrf.mxu0
          %v1007 = vadd.f32 0.0, %v1006
          %1008 = vmatmul.f32.gmra.mxu0 %v743
          %v1009 = vpop.f32.mrf.mxu0
          %v1010 = vadd.f32 0.0, %v1009
          %1011 = vmatmul.f32.gmra.mxu0 %v745
          %v1012 = vpop.f32.mrf.mxu0
          %v1013 = vadd.f32 0.0, %v1012
          %1014 = vmatmul.f32.gmra.mxu0 %v747
          %v1015 = vpop.f32.mrf.mxu0
          %v1016 = vadd.f32 0.0, %v1015
          %1017 = vdwg.mxu0
          %1018 = vmatpush.xpose.msra.mxu0 0.0
          %1019 = vmatpush.xpose.msra.mxu0 0.0
          %1020 = vmatpush.xpose.msra.mxu0 0.0
          %1021 = vmatpush.xpose.msra.mxu0 0.0
          %1022 = vmatpush.xpose.msra.mxu0 0.0
          %1023 = vmatpush.xpose.msra.mxu0 0.0
          %1024 = vmatpush.xpose.msra.mxu0 0.0
          %1025 = vmatpush.xpose.msra.mxu0 0.0
          %1026 = vmatpush.xpose.msra.mxu0 0.0
          %1027 = vmatpush.xpose.msra.mxu0 0.0
          %1028 = vmatpush.xpose.msra.mxu0 0.0
          %1029 = vmatpush.xpose.msra.mxu0 0.0
          %1030 = vmatpush.xpose.msra.mxu0 %v365
          %1031 = vmatpush.xpose.msra.mxu0 %v363
          %1032 = vmatpush.xpose.msra.mxu0 %v361
          %1033 = vmatpush.xpose.msra.mxu0 %v359
          %1034 = vmatmul.f32.gmra.mxu0 %v742
          %v1035 = vpop.f32.mrf.mxu0
          %v1036 = vadd.f32 %v1007, %v1035
          %1037 = vmatmul.f32.gmra.mxu0 %v744
          %v1038 = vpop.f32.mrf.mxu0
          %v1039 = vadd.f32 %v1010, %v1038
          %1040 = vmatmul.f32.gmra.mxu0 %v746
          %v1041 = vpop.f32.mrf.mxu0
          %v1042 = vadd.f32 %v1013, %v1041
          %1043 = vmatmul.f32.gmra.mxu0 %v748
          %v1044 = vpop.f32.mrf.mxu0
          %v1045 = vadd.f32 %v1016, %v1044
          %1046 = vdwg.mxu0
          %v1047 = vmul.f32 %v1036, 0.125
          %v1048 = vmul.f32 %v1039, 0.125
          %v1049 = vmul.f32 %v1042, 0.125
          %v1050 = vmul.f32 %v1045, 0.125
          %1051 = vmatpush.xpose.msra.mxu0 %v341
          %1052 = vmatpush.xpose.msra.mxu0 %v340
          %1053 = vmatpush.xpose.msra.mxu0 %v339
          %1054 = vmatpush.xpose.msra.mxu0 %v338
          %1055 = vmatpush.xpose.msra.mxu0 %v337
          %1056 = vmatpush.xpose.msra.mxu0 %v336
          %1057 = vmatpush.xpose.msra.mxu0 %v335
          %1058 = vmatpush.xpose.msra.mxu0 %v334
          %1059 = vmatpush.xpose.msra.mxu0 %v333
          %1060 = vmatpush.xpose.msra.mxu0 %v332
          %1061 = vmatpush.xpose.msra.mxu0 %v331
          %1062 = vmatpush.xpose.msra.mxu0 %v330
          %1063 = vmatpush.xpose.msra.mxu0 %v329
          %1064 = vmatpush.xpose.msra.mxu0 %v328
          %1065 = vmatpush.xpose.msra.mxu0 %v327
          %1066 = vmatpush.xpose.msra.mxu0 %v326
          %1067 = vmatmul.f32.gmra.mxu0 %v922
          %v1068 = vpop.f32.mrf.mxu0
          %v1069 = vadd.f32 0.0, %v1068
          %1070 = vmatmul.f32.gmra.mxu0 %v924
          %v1071 = vpop.f32.mrf.mxu0
          %v1072 = vadd.f32 0.0, %v1071
          %1073 = vmatmul.f32.gmra.mxu0 %v927
          %v1074 = vpop.f32.mrf.mxu0
          %v1075 = vadd.f32 0.0, %v1074
          %1076 = vmatmul.f32.gmra.mxu0 %v929
          %v1077 = vpop.f32.mrf.mxu0
          %v1078 = vadd.f32 0.0, %v1077
          %1079 = vdwg.mxu0
          %1080 = vmatpush.xpose.msra.mxu0 %v357
          %1081 = vmatpush.xpose.msra.mxu0 %v356
          %1082 = vmatpush.xpose.msra.mxu0 %v355
          %1083 = vmatpush.xpose.msra.mxu0 %v354
          %1084 = vmatpush.xpose.msra.mxu0 %v353
          %1085 = vmatpush.xpose.msra.mxu0 %v352
          %1086 = vmatpush.xpose.msra.mxu0 %v351
          %1087 = vmatpush.xpose.msra.mxu0 %v350
          %1088 = vmatpush.xpose.msra.mxu0 %v349
          %1089 = vmatpush.xpose.msra.mxu0 %v348
          %1090 = vmatpush.xpose.msra.mxu0 %v347
          %1091 = vmatpush.xpose.msra.mxu0 %v346
          %1092 = vmatpush.xpose.msra.mxu0 %v345
          %1093 = vmatpush.xpose.msra.mxu0 %v344
          %1094 = vmatpush.xpose.msra.mxu0 %v343
          %1095 = vmatpush.xpose.msra.mxu0 %v342
          %1096 = vmatmul.f32.gmra.mxu0 %v922
          %v1097 = vpop.f32.mrf.mxu0
          %v1098 = vadd.f32 0.0, %v1097
          %1099 = vmatmul.f32.gmra.mxu0 %v924
          %v1100 = vpop.f32.mrf.mxu0
          %v1101 = vadd.f32 0.0, %v1100
          %1102 = vmatmul.f32.gmra.mxu0 %v927
          %v1103 = vpop.f32.mrf.mxu0
          %v1104 = vadd.f32 0.0, %v1103
          %1105 = vmatmul.f32.gmra.mxu0 %v929
          %v1106 = vpop.f32.mrf.mxu0
          %v1107 = vadd.f32 0.0, %v1106
          %1108 = vdwg.mxu0
          %v1109 = vmul.f32 %v1069, 0.0625
          %v1110 = vmul.f32 %v1098, 0.0625
          %v1111 = vmul.f32 %v1072, 0.0625
          %v1112 = vmul.f32 %v1101, 0.0625
          %v1113 = vmul.f32 %v1075, 0.0625
          %v1114 = vmul.f32 %v1104, 0.0625
          %v1115 = vmul.f32 %v1078, 0.0625
          %v1116 = vmul.f32 %v1107, 0.0625
          %v1117 = vrcp.pop %v1109
          %v1118 = vrcp.pop %v1110
          %v1119 = vrcp.pop %v1111
          %v1120 = vrcp.pop %v1112
          %v1121 = vrcp.pop %v1113
          %v1122 = vrcp.pop %v1114
          %v1123 = vrcp.pop %v1115
          %v1124 = vrcp.pop %v1116
          %v1125 = vmul.f32 %v778, %v1117
          %v1126 = vmul.f32 %v780, %v1118
          %v1127 = vmul.f32 %v782, %v1119
          %v1128 = vmul.f32 %v784, %v1120
          %v1129 = vmul.f32 %v786, %v1121
          %v1130 = vmul.f32 %v788, %v1122
          %v1131 = vmul.f32 %v790, %v1123
          %v1132 = vmul.f32 %v792, %v1124
          %1133 = vmatpush.xpose.msra.mxu0 0.0
          %1134 = vmatpush.xpose.msra.mxu0 0.0
          %1135 = vmatpush.xpose.msra.mxu0 0.0
          %1136 = vmatpush.xpose.msra.mxu0 0.0
          %1137 = vmatpush.xpose.msra.mxu0 0.0
          %1138 = vmatpush.xpose.msra.mxu0 0.0
          %1139 = vmatpush.xpose.msra.mxu0 0.0
          %1140 = vmatpush.xpose.msra.mxu0 0.0
          %1141 = vmatpush.xpose.msra.mxu0 0.0
          %1142 = vmatpush.xpose.msra.mxu0 0.0
          %1143 = vmatpush.xpose.msra.mxu0 0.0
          %1144 = vmatpush.xpose.msra.mxu0 0.0
          %1145 = vmatpush.xpose.msra.mxu0 %v364
          %1146 = vmatpush.xpose.msra.mxu0 %v362
          %1147 = vmatpush.xpose.msra.mxu0 %v360
          %1148 = vmatpush.xpose.msra.mxu0 %v358
          %1149 = vmatmul.f32.gmra.mxu0 %v1125
          %v1150 = vpop.f32.mrf.mxu0
          %v1151 = vadd.f32 0.0, %v1150
          %1152 = vmatmul.f32.gmra.mxu0 %v1127
          %v1153 = vpop.f32.mrf.mxu0
          %v1154 = vadd.f32 0.0, %v1153
          %1155 = vmatmul.f32.gmra.mxu0 %v1129
          %v1156 = vpop.f32.mrf.mxu0
          %v1157 = vadd.f32 0.0, %v1156
          %1158 = vmatmul.f32.gmra.mxu0 %v1131
          %v1159 = vpop.f32.mrf.mxu0
          %v1160 = vadd.f32 0.0, %v1159
          %1161 = vdwg.mxu0
          %1162 = vmatpush.xpose.msra.mxu0 0.0
          %1163 = vmatpush.xpose.msra.mxu0 0.0
          %1164 = vmatpush.xpose.msra.mxu0 0.0
          %1165 = vmatpush.xpose.msra.mxu0 0.0
          %1166 = vmatpush.xpose.msra.mxu0 0.0
          %1167 = vmatpush.xpose.msra.mxu0 0.0
          %1168 = vmatpush.xpose.msra.mxu0 0.0
          %1169 = vmatpush.xpose.msra.mxu0 0.0
          %1170 = vmatpush.xpose.msra.mxu0 0.0
          %1171 = vmatpush.xpose.msra.mxu0 0.0
          %1172 = vmatpush.xpose.msra.mxu0 0.0
          %1173 = vmatpush.xpose.msra.mxu0 0.0
          %1174 = vmatpush.xpose.msra.mxu0 %v365
          %1175 = vmatpush.xpose.msra.mxu0 %v363
          %1176 = vmatpush.xpose.msra.mxu0 %v361
          %1177 = vmatpush.xpose.msra.mxu0 %v359
          %1178 = vmatmul.f32.gmra.mxu0 %v1126
          %v1179 = vpop.f32.mrf.mxu0
          %v1180 = vadd.f32 %v1151, %v1179
          %1181 = vmatmul.f32.gmra.mxu0 %v1128
          %v1182 = vpop.f32.mrf.mxu0
          %v1183 = vadd.f32 %v1154, %v1182
          %1184 = vmatmul.f32.gmra.mxu0 %v1130
          %v1185 = vpop.f32.mrf.mxu0
          %v1186 = vadd.f32 %v1157, %v1185
          %1187 = vmatmul.f32.gmra.mxu0 %v1132
          %v1188 = vpop.f32.mrf.mxu0
          %v1189 = vadd.f32 %v1160, %v1188
          %1190 = vdwg.mxu0
          %v1191 = vmul.f32 %v1180, 0.125
          %v1192 = vmul.f32 %v1183, 0.125
          %v1193 = vmul.f32 %v1186, 0.125
          %v1194 = vmul.f32 %v1189, 0.125
          %vm1195 = vcmask 261120
          %v1196 = vsel %vm1195, %v1191, -inf
          %1197 = vmax.xlane.f32.xlu0 %v1196
          %v1198 = vpop.xlane.xlu0 %1197
          %v1199 = vsel %vm1195, %v1192, -inf
          %1200 = vmax.xlane.f32.xlu0 %v1199
          %v1201 = vpop.xlane.xlu0 %1200
          %v1202 = vsel %vm1195, %v1193, -inf
          %1203 = vmax.xlane.f32.xlu0 %v1202
          %v1204 = vpop.xlane.xlu0 %1203
          %v1205 = vsel %vm1195, %v1194, -inf
          %1206 = vmax.xlane.f32.xlu0 %v1205
          %v1207 = vpop.xlane.xlu0 %1206
          %v1208 = vsub.f32 %v1191, %v1198
          %v1209 = vsub.f32 %v1192, %v1201
          %v1210 = vsub.f32 %v1193, %v1204
          %v1211 = vsub.f32 %v1194, %v1207
          %v1212 = vmul.f32 %v1208, 1.442695
          %v1213 = vpow.pop %v1212
          %v1214 = vmul.f32 %v1209, 1.442695
          %v1215 = vpow.pop %v1214
          %v1216 = vmul.f32 %v1210, 1.442695
          %v1217 = vpow.pop %v1216
          %v1218 = vmul.f32 %v1211, 1.442695
          %v1219 = vpow.pop %v1218
          %v1220 = vsel %vm1195, %v1213, 0.0
          %1221 = vadd.xlane.f32.xlu0 %v1220
          %v1222 = vpop.xlane.xlu0 %1221
          %v1223 = vsel %vm1195, %v1215, 0.0
          %1224 = vadd.xlane.f32.xlu0 %v1223
          %v1225 = vpop.xlane.xlu0 %1224
          %v1226 = vsel %vm1195, %v1217, 0.0
          %1227 = vadd.xlane.f32.xlu0 %v1226
          %v1228 = vpop.xlane.xlu0 %1227
          %v1229 = vsel %vm1195, %v1219, 0.0
          %1230 = vadd.xlane.f32.xlu0 %v1229
          %v1231 = vpop.xlane.xlu0 %1230
          %v1232 = vrcp.pop %v1222
          %v1233 = vrcp.pop %v1225
          %v1234 = vrcp.pop %v1228
          %v1235 = vrcp.pop %v1231
          %v1236 = vmul.f32 %v1213, %v1232
          %v1237 = vmul.f32 %v1215, %v1233
          %v1238 = vmul.f32 %v1217, %v1234
          %v1239 = vmul.f32 %v1219, %v1235
          %vm1240 = vcmp.gt.f32.partialorder %v1047, 0.75
          %vm1241 = vcmp.gt.f32.partialorder %v1048, 0.75
          %vm1242 = vcmp.gt.f32.partialorder %v1049, 0.75
          %vm1243 = vcmp.gt.f32.partialorder %v1050, 0.75
          %v1244 = vsel %vm1240, 1.0, 0.0
          %v1245 = vsel %vm1241, 1.0, 0.0
          %v1246 = vsel %vm1242, 1.0, 0.0
          %v1247 = vsel %vm1243, 1.0, 0.0
          %v1248 = vmul.f32 %v1244, %v1236
          %v1249 = vmul.f32 %v1245, %v1237
          %v1250 = vmul.f32 %v1246, %v1238
          %v1251 = vmul.f32 %v1247, %v1239
          %v1252 = vsel %vm1195, %v1248, 0.0
          %1253 = vadd.xlane.f32.xlu0 %v1252
          %v1254 = vpop.xlane.xlu0 %1253
          %v1255 = vsel %vm1195, %v1249, 0.0
          %1256 = vadd.xlane.f32.xlu0 %v1255
          %v1257 = vpop.xlane.xlu0 %1256
          %v1258 = vsel %vm1195, %v1250, 0.0
          %1259 = vadd.xlane.f32.xlu0 %v1258
          %v1260 = vpop.xlane.xlu0 %1259
          %v1261 = vsel %vm1195, %v1251, 0.0
          %1262 = vadd.xlane.f32.xlu0 %v1261
          %v1263 = vpop.xlane.xlu0 %1262
          %v1264 = vrcp.pop %v1254
          %v1265 = vrcp.pop %v1257
          %v1266 = vrcp.pop %v1260
          %v1267 = vrcp.pop %v1263
          %v1268 = vmul.f32 %v1248, %v1264
          %v1269 = vmul.f32 %v1249, %v1265
          %v1270 = vmul.f32 %v1250, %v1266
          %v1271 = vmul.f32 %v1251, %v1267
          %1272 = vst.msk [vmem:[%s305] sm:$0xff] %vm1195, %v1268
          %1273 = vst.msk [vmem:[%s305 + $0x8] sm:$0xff] %vm1195, %v1269
          %1274 = vst.msk [vmem:[%s305 + $0x10] sm:$0xff] %vm1195, %v1270
          %1275 = vst.msk [vmem:[%s305 + $0x18] sm:$0xff] %vm1195, %v1271
        $region56: #{tpu_custom_call.1} parent=35 // pred_fallthru
          _
        %p1276 = scmp.ne.s32.totalorder %s28, 0
        // Predicated region
        $region57: #{tpu_custom_call.1} parent=35 // pred_check
          %p1277 = pneg %p1276
        $region58: #{tpu_custom_call.1} parent=35 // pred_check_branch
          %1279 = sbr.rel (%p1277) target = $region60
        $region59: #{tpu_custom_call.1} parent=35 // pred_region
          %vm1280 = vcmask 261120
          %1281 = vst.msk [vmem:[%s305] sm:$0xff] %vm1280, 0.0
          %1282 = vst.msk [vmem:[%s305 + $0x8] sm:$0xff] %vm1280, 0.0
          %1283 = vst.msk [vmem:[%s305 + $0x10] sm:$0xff] %vm1280, 0.0
          %1284 = vst.msk [vmem:[%s305 + $0x18] sm:$0xff] %vm1280, 0.0
        $region60: #{tpu_custom_call.1} parent=35 // pred_fallthru
          _
        %s1285 = sand.u32 %s125, 1
        %s1286 = scalar_lea.sflag [#allocation4], %s1285
        %s1287 = sand.u32 %s125, 1
        %s1288 = smul.addr %s1287, 64
        %s1289 = scalar_lea.vmem [#allocation10], %s1288
        %s1290 = sand.u32 %s151, 1
        %s1291 = scalar_lea.sflag [#allocation12], %s1290
        %s1292 = sand.u32 %s151, 1
        %s1293 = smul.addr %s1292, 32
        %s1294 = scalar_lea.vmem [#allocation11], %s1293
        // Predicated region
        $region61: #{tpu_custom_call.1} parent=35 // pred_check
          %p1295 = pneg %p135
        $region62: #{tpu_custom_call.1} parent=35 // pred_check_branch
          %1297 = sbr.rel (%p1295) target = $region64
        $region63: #{tpu_custom_call.1} parent=35 // pred_region
          %1299 = vsyncadd %s1286, 0
          %s1300 = smul.addr %s28, 8
          %s1301 = smul.addr %s1300, 8
          %s1302 = scalar_lea.hbm %s4, %s1301
          %s1303 = sshll.u32 %s1289, 4
          %s1304 = int_to_ptr.vmem [resolvable:$true] %s1303
          %s1305 = sshll.u32 %s1302, 4
          %s1306 = int_to_ptr.hbm [resolvable:$true] %s1305
          %1311 = dma.vmem_to_hbm [thread:$0]  %s1304, 1024, %s1306, %s1286, 256, 256, 16
        $region64: #{tpu_custom_call.1} parent=35 // pred_fallthru
          _
        // Predicated region
        $region65: #{tpu_custom_call.1} parent=35 // pred_check
          %p1312 = pneg %p161
        $region66: #{tpu_custom_call.1} parent=35 // pred_check_branch
          %1314 = sbr.rel (%p1312) target = $region68
        $region67: #{tpu_custom_call.1} parent=35 // pred_region
          %1316 = vsyncadd %s1291, 0
          %s1317 = smul.addr %s28, 4
          %s1318 = smul.addr %s1317, 8
          %s1319 = scalar_lea.hbm %s5, %s1318
          %s1320 = sshll.u32 %s1294, 4
          %s1321 = int_to_ptr.vmem [resolvable:$true] %s1320
          %s1322 = sshll.u32 %s1319, 4
          %s1323 = int_to_ptr.hbm [resolvable:$true] %s1322
          %1328 = dma.vmem_to_hbm [thread:$0]  %s1321, 512, %s1323, %s1291, 128, 128, 8
        $region68: #{tpu_custom_call.1} parent=35 // pred_fallthru
          _
      $region36: #{tpu_custom_call.1} parent=5 // pred_fallthru
        _
      %p1329 = scmp.le.s32.totalorder 2, %s23
      // Predicated region
      $region69: #{tpu_custom_call.1} parent=5 // pred_check
        %p1330 = pneg %p1329
      $region70: #{tpu_custom_call.1} parent=5 // pred_check_branch
        %1332 = sbr.rel (%p1330) target = $region72
      $region71: #{tpu_custom_call.1} parent=5 // pred_region
        %s1333 = ssub.s32 %s23, 2
        // Predicated region
        $region73: #{tpu_custom_call.1} parent=71 // pred_check
          %p1334 = pneg %p141
        $region74: #{tpu_custom_call.1} parent=71 // pred_check_branch
          %1336 = sbr.rel (%p1334) target = $region76
        $region75: #{tpu_custom_call.1} parent=71 // pred_region
          %s1337 = sand.u32 %s126, 1
          %s1338 = scalar_lea.sflag [#allocation4], %s1337
          %s1339 = sand.u32 %s126, 1
          %s1340 = smul.addr %s1339, 64
          %s1341 = scalar_lea.vmem [#allocation10], %s1340
          %1343 = dma.done %s1338, 1024
        $region76: #{tpu_custom_call.1} parent=71 // pred_fallthru
          _
        // Predicated region
        $region77: #{tpu_custom_call.1} parent=71 // pred_check
          %p1344 = pneg %p167
        $region78: #{tpu_custom_call.1} parent=71 // pred_check_branch
          %1346 = sbr.rel (%p1344) target = $region80
        $region79: #{tpu_custom_call.1} parent=71 // pred_region
          %s1347 = sand.u32 %s152, 1
          %s1348 = scalar_lea.sflag [#allocation12], %s1347
          %s1349 = sand.u32 %s152, 1
          %s1350 = smul.addr %s1349, 32
          %s1351 = scalar_lea.vmem [#allocation11], %s1350
          %1353 = dma.done %s1348, 512
        $region80: #{tpu_custom_call.1} parent=71 // pred_fallthru
          _
      $region72: #{tpu_custom_call.1} parent=5 // pred_fallthru
        _
    $region6: #{tpu_custom_call.1} parent=1 // loop_footer
      %s27 = sadd.s32 1, %s23
    $region7: #{tpu_custom_call.1} parent=1 // loop_footer_branch
      %22 = sbr.rel target = $region3
    $region8: #{tpu_custom_call.1} parent=1 // loop_exit
      _
    %1354 = vsyncpa [#allocation3], 1
    %s1355 = scalar_lea.sflag [#allocation3], 1
    %1356 = vsyncpa %s1355, 1
    %1357 = vsyncpa [#allocation6], 1
    %1358 = vsyncpa [#allocation9], 1
    %1359 = vsyncpa [#allocation4], 1
    %s1360 = scalar_lea.sflag [#allocation4], 1
    %1361 = vsyncpa %s1360, 1
    %1362 = vsyncpa [#allocation12], 1
    %s1363 = scalar_lea.sflag [#allocation12], 1
    %1364 = vsyncpa %s1363, 1

</llo_original>
